<compile_context>
chip_gen: v7x
topology: tpu7x:2x2x1
jax: 0.10.0
libtpu: 0.0.40
codegen_flags: <defaults>
</compile_context>

<pallas_src>
import functools

import jax
import jax.numpy as jnp
from jax.experimental import pallas as pl
from jax.experimental.pallas import tpu as pltpu


def _mha_kernel(q_ref, k_ref, v_ref,
                wq_ref, bq_ref, wk_ref, bk_ref, wv_ref, bv_ref,
                wm_ref, bm_ref, o_ref,
                kp_scr, vp_scr, *, num_heads, head_dim):
    H, D = num_heads, head_dim
    qi = pl.program_id(1)

    # --- K/V projections: only when entering a new batch (query-block 0). ---
    @pl.when(qi == 0)
    def _():
        kx = k_ref[...].astype(jnp.bfloat16)
        vx = v_ref[...].astype(jnp.bfloat16)
        kp = jnp.dot(wk_ref[...], kx, preferred_element_type=jnp.float32) + bk_ref[...]
        vp = jnp.dot(wv_ref[...], vx, preferred_element_type=jnp.float32) + bv_ref[...]
        kp_scr[...] = kp.astype(jnp.bfloat16).reshape(H, D, kp.shape[-1])
        vp_scr[...] = vp.astype(jnp.bfloat16).reshape(H, D, vp.shape[-1])

    # --- Q projection for this query block (1/sqrt(D) already folded in). ---
    qx = q_ref[...].astype(jnp.bfloat16)
    qp = jnp.dot(wq_ref[...], qx, preferred_element_type=jnp.float32) + bq_ref[...]
    qh = qp.astype(jnp.bfloat16).reshape(H, D, qp.shape[-1])    # (H, D, Nq)

    kh = kp_scr[...]                                            # (H, D, M)
    vh = vp_scr[...]                                            # (H, D, M)

    # scores[h, m, n] = sum_d k[h, d, m] * q[h, d, n]   (key index m on sublanes)
    s = jax.lax.dot_general(kh, qh, (((1,), (1,)), ((0,), (0,))),
                            preferred_element_type=jnp.float32)  # (H, M, Nq) f32

    # softmax over keys (axis=1); elementwise math stays in f32, divide -> EUP.
    s = s - jnp.max(s, axis=1, keepdims=True)
    e = jnp.exp(s)
    p = e * pl.reciprocal(jnp.sum(e, axis=1, keepdims=True), approx=True)
    p = p.astype(jnp.bfloat16)

    # context[h, d, n] = sum_m v[h, d, m] * p[h, m, n] -- natural contraction,
    # probability matrix consumed untransposed.
    x = jax.lax.dot_general(vh, p, (((2,), (1,)), ((0,), (0,))),
                            preferred_element_type=jnp.float32)  # (H, D, Nq) f32
    x = x.reshape(H * D, x.shape[-1]).astype(jnp.bfloat16)       # head-major rows

    out = jnp.dot(wm_ref[...], x, preferred_element_type=jnp.float32) + bm_ref[...]
    o_ref[...] = out.astype(o_ref.dtype)


def prepare_params(params, num_heads):
    """One-time parameter preprocessing (hoisted off the forward critical path).

    Permutes projection rows / merge columns to head-major order, folds the
    1/sqrt(head_dim) attention scale into the query projection, and casts the
    MXU operands (weights) to bf16.  Biases stay f32 (added post-accumulation).
    """
    wq, bq, wk, bk, wv, bv, wm, bm = params
    d_model = wq.shape[0]
    assert d_model % num_heads == 0
    head_dim = d_model // num_heads
    assert head_dim % 8 == 0, "head_dim must be a multiple of 8 for TPU sublane tiling"

    # PyTorch .view(B, head_dim, num_heads, L) uses channel index c = d*num_heads + h.
    # perm[h*head_dim + d] = d*num_heads + h  -> head-major channel ordering.
    perm = jnp.arange(d_model).reshape(head_dim, num_heads).T.reshape(-1)
    scale = 1.0 / (head_dim ** 0.5)

    return (
        (wq[perm, :] * scale).astype(jnp.bfloat16),
        (bq[perm] * scale).reshape(d_model, 1).astype(jnp.float32),
        wk[perm, :].astype(jnp.bfloat16),
        bk[perm].reshape(d_model, 1).astype(jnp.float32),
        wv[perm, :].astype(jnp.bfloat16),
        bv[perm].reshape(d_model, 1).astype(jnp.float32),
        wm[:, perm].astype(jnp.bfloat16),
        bm.reshape(d_model, 1).astype(jnp.float32),
    )


def multi_headed_attention(q, k, v, prepared_params, num_heads, *, block_q=128):
    B, d_model, L_q = q.shape
    _, _, L_kv = k.shape
    assert d_model % num_heads == 0
    head_dim = d_model // num_heads
    assert head_dim % 8 == 0

    block_q = min(block_q, L_q)
    # TODO(synk): pad/mask a ragged last query block instead of requiring divisibility.
    assert L_q % block_q == 0, "query length must be divisible by block_q"
    n_qblocks = L_q // block_q

    wq, bq, wk, bk, wv, bv, wm, bm = prepared_params

    q_spec = pl.BlockSpec((None, d_model, block_q), lambda b, i: (b, 0, i))
    kv_spec = pl.BlockSpec((None, d_model, L_kv), lambda b, i: (b, 0, 0))
    w_spec = pl.BlockSpec((d_model, d_model), lambda b, i: (0, 0))
    b_spec = pl.BlockSpec((d_model, 1), lambda b, i: (0, 0))
    o_spec = pl.BlockSpec((None, d_model, block_q), lambda b, i: (b, 0, i))

    kernel = functools.partial(_mha_kernel, num_heads=num_heads, head_dim=head_dim)
    return pl.pallas_call(
        kernel,
        out_shape=jax.ShapeDtypeStruct((B, d_model, L_q), q.dtype),
        grid_spec=pltpu.PrefetchScalarGridSpec(
            num_scalar_prefetch=0,
            grid=(B, n_qblocks),
            in_specs=[q_spec, kv_spec, kv_spec,
                      w_spec, b_spec, w_spec, b_spec, w_spec, b_spec,
                      w_spec, b_spec],
            out_specs=o_spec,
            scratch_shapes=[
                pltpu.VMEM((num_heads, head_dim, L_kv), jnp.bfloat16),  # cached K proj
                pltpu.VMEM((num_heads, head_dim, L_kv), jnp.bfloat16),  # cached V proj
            ],
        ),
        compiler_params=pltpu.CompilerParams(
            # batch axis parallel (megacore); query-block axis must stay in-order
            # so the qi==0 K/V-projection cache is valid.
            dimension_semantics=("parallel", "arbitrary")),
    )(q, k, v, wq, bq, wk, bk, wv, bv, wm, bm)


def reference_forward(q, k, v, params, num_heads):
    """Pure-JAX f32 mirror of the PyTorch forward (validation only)."""
    B, d_model, _ = q.shape
    head_dim = d_model // num_heads
    wq, bq, wk, bk, wv, bv, wm, bm = params

    def conv1x1(x, w, b):
        return jnp.einsum('oc,bcl->bol', w, x) + b[None, :, None]

    qp = conv1x1(q, wq, bq).reshape(B, head_dim, num_heads, -1)
    kp = conv1x1(k, wk, bk).reshape(B, head_dim, num_heads, -1)
    vp = conv1x1(v, wv, bv).reshape(B, head_dim, num_heads, -1)
    scores = jnp.einsum('bdhn,bdhm->bhnm', qp, kp) / (head_dim ** 0.5)
    prob = jax.nn.softmax(scores, axis=-1)
    x = jnp.einsum('bhnm,bdhm->bdhn', prob, vp).reshape(B, d_model, -1)
    return conv1x1(x, wm, bm)


if __name__ == "__main__":
    B, num_heads, d_model = 2, 4, 64            # head_dim = 16
    L_q, L_kv = 256, 128                        # cross-attention style lengths

    key = jax.random.PRNGKey(0)
    ks = jax.random.split(key, 11)
    init_scale = 1.0 / (d_model ** 0.5)

    def w_init(kk):
        return jax.random.uniform(kk, (d_model, d_model), jnp.float32, -init_scale, init_scale)

    def b_init(kk):
        return jax.random.uniform(kk, (d_model,), jnp.float32, -init_scale, init_scale)

    # proj[0], proj[1], proj[2], merge (distinct deterministic params)
    params = (w_init(ks[0]), b_init(ks[1]),
              w_init(ks[2]), b_init(ks[3]),
              w_init(ks[4]), b_init(ks[5]),
              w_init(ks[6]), b_init(ks[7]))

    q = jax.random.normal(ks[8], (B, d_model, L_q), jnp.float32)
    k_in = jax.random.normal(ks[9], (B, d_model, L_kv), jnp.float32)
    v = jax.random.normal(ks[10], (B, d_model, L_kv), jnp.float32)

    prepared = prepare_params(params, num_heads)          # one-time setup
    out = multi_headed_attention(q, k_in, v, prepared, num_heads, block_q=128)
    out = jax.block_until_ready(out)

    ref = reference_forward(q, k_in, v, params, num_heads)
    assert out.shape == (B, d_model, L_q)
    max_err = float(jnp.max(jnp.abs(out - ref)))
    # Tolerance relaxed vs the f32 reference because MXU operands are bf16.
    assert jnp.allclose(out, ref, rtol=3e-2, atol=3e-2), (
        f"Pallas output mismatch vs reference (max abs err {max_err})")
    print("KERNEL_OK")
</pallas_src>

<mosaic_0001>
module attributes {stable_mosaic.version = 11 : i64} {
  func.func @_mha_kernel(%arg0: i32, %arg1: i32, %arg2: memref<1x64x128xf32, #tpu.memory_space<vmem>>, %arg3: memref<1x64x128xf32, #tpu.memory_space<vmem>>, %arg4: memref<1x64x128xf32, #tpu.memory_space<vmem>>, %arg5: memref<64x64xbf16, #tpu.memory_space<vmem>>, %arg6: memref<64x1xf32, #tpu.memory_space<vmem>>, %arg7: memref<64x64xbf16, #tpu.memory_space<vmem>>, %arg8: memref<64x1xf32, #tpu.memory_space<vmem>>, %arg9: memref<64x64xbf16, #tpu.memory_space<vmem>>, %arg10: memref<64x1xf32, #tpu.memory_space<vmem>>, %arg11: memref<64x64xbf16, #tpu.memory_space<vmem>>, %arg12: memref<64x1xf32, #tpu.memory_space<vmem>>, %arg13: memref<1x64x128xf32, #tpu.memory_space<vmem>>, %arg14: memref<4x16x128xbf16, #tpu.memory_space<vmem>>, %arg15: memref<4x16x128xbf16, #tpu.memory_space<vmem>>) attributes {dimension_semantics = [#tpu.dimension_semantics<parallel>, #tpu.dimension_semantics<arbitrary>], iteration_bounds = array<i64: 2, 2>, scalar_prefetch = 0 : i64, scratch_operands = 2 : i64, tpu.core_type = #tpu.core_type<tc>, window_params = [{transform_indices = @transform_0, window_bounds = array<i64: 1, 64, 128>}, {transform_indices = @transform_1, window_bounds = array<i64: 1, 64, 128>}, {transform_indices = @transform_2, window_bounds = array<i64: 1, 64, 128>}, {pipeline_mode = #tpu.pipeline_mode<synchronous>, transform_indices = @transform_3, window_bounds = array<i64: 64, 64>}, {pipeline_mode = #tpu.pipeline_mode<synchronous>, transform_indices = @transform_4, window_bounds = array<i64: 64, 1>}, {pipeline_mode = #tpu.pipeline_mode<synchronous>, transform_indices = @transform_5, window_bounds = array<i64: 64, 64>}, {pipeline_mode = #tpu.pipeline_mode<synchronous>, transform_indices = @transform_6, window_bounds = array<i64: 64, 1>}, {pipeline_mode = #tpu.pipeline_mode<synchronous>, transform_indices = @transform_7, window_bounds = array<i64: 64, 64>}, {pipeline_mode = #tpu.pipeline_mode<synchronous>, transform_indices = @transform_8, window_bounds = array<i64: 64, 1>}, {pipeline_mode = #tpu.pipeline_mode<synchronous>, transform_indices = @transform_9, window_bounds = array<i64: 64, 64>}, {pipeline_mode = #tpu.pipeline_mode<synchronous>, transform_indices = @transform_10, window_bounds = array<i64: 64, 1>}, {transform_indices = @transform_11, window_bounds = array<i64: 1, 64, 128>}]} {
    %c0_i32 = arith.constant 0 : i32
    %0 = arith.cmpi eq, %arg1, %c0_i32 : i32
    %1 = arith.extui %0 : i1 to i32
    %c0_i32_0 = arith.constant 0 : i32
    %2 = arith.cmpi ne, %1, %c0_i32_0 : i32
    scf.if %2 {
      %c0_25 = arith.constant 0 : index
      %c0_26 = arith.constant 0 : index
      %c0_27 = arith.constant 0 : index
      %38 = vector.load %arg3[%c0_25, %c0_26, %c0_27] : memref<1x64x128xf32, #tpu.memory_space<vmem>>, vector<1x64x128xf32>
      %39 = vector.shape_cast %38 : vector<1x64x128xf32> to vector<64x128xf32>
      %40 = arith.truncf %39 : vector<64x128xf32> to vector<64x128xbf16>
      %c0_28 = arith.constant 0 : index
      %c0_29 = arith.constant 0 : index
      %c0_30 = arith.constant 0 : index
      %41 = vector.load %arg4[%c0_28, %c0_29, %c0_30] : memref<1x64x128xf32, #tpu.memory_space<vmem>>, vector<1x64x128xf32>
      %42 = vector.shape_cast %41 : vector<1x64x128xf32> to vector<64x128xf32>
      %43 = arith.truncf %42 : vector<64x128xf32> to vector<64x128xbf16>
      %c0_31 = arith.constant 0 : index
      %c0_32 = arith.constant 0 : index
      %44 = vector.load %arg7[%c0_31, %c0_32] : memref<64x64xbf16, #tpu.memory_space<vmem>>, vector<64x64xbf16>
      %cst_33 = arith.constant dense<0.000000e+00> : vector<64x128xf32>
      %45 = tpu.matmul %44, %40, %cst_33 {dimension_numbers = #tpu.dot_dimension_numbers<[1], [0], [0], [1], [0, 0, 1, 1], [], []>} : vector<64x64xbf16>, vector<64x128xbf16>, vector<64x128xf32> -> vector<64x128xf32>
      %c0_34 = arith.constant 0 : index
      %c0_35 = arith.constant 0 : index
      %46 = vector.load %arg8[%c0_34, %c0_35] : memref<64x1xf32, #tpu.memory_space<vmem>>, vector<64x1xf32>
      %47 = vector.broadcast %46 : vector<64x1xf32> to vector<64x128xf32>
      %48 = arith.addf %45, %47 : vector<64x128xf32>
      %c0_36 = arith.constant 0 : index
      %c0_37 = arith.constant 0 : index
      %49 = vector.load %arg9[%c0_36, %c0_37] : memref<64x64xbf16, #tpu.memory_space<vmem>>, vector<64x64xbf16>
      %cst_38 = arith.constant dense<0.000000e+00> : vector<64x128xf32>
      %50 = tpu.matmul %49, %43, %cst_38 {dimension_numbers = #tpu.dot_dimension_numbers<[1], [0], [0], [1], [0, 0, 1, 1], [], []>} : vector<64x64xbf16>, vector<64x128xbf16>, vector<64x128xf32> -> vector<64x128xf32>
      %c0_39 = arith.constant 0 : index
      %c0_40 = arith.constant 0 : index
      %51 = vector.load %arg10[%c0_39, %c0_40] : memref<64x1xf32, #tpu.memory_space<vmem>>, vector<64x1xf32>
      %52 = vector.broadcast %51 : vector<64x1xf32> to vector<64x128xf32>
      %53 = arith.addf %50, %52 : vector<64x128xf32>
      %54 = arith.truncf %48 : vector<64x128xf32> to vector<64x128xbf16>
      %55 = vector.shape_cast %54 : vector<64x128xbf16> to vector<4x16x128xbf16>
      %c0_41 = arith.constant 0 : index
      %c0_42 = arith.constant 0 : index
      %c0_43 = arith.constant 0 : index
      %56 = vector.load %arg14[%c0_41, %c0_42, %c0_43] : memref<4x16x128xbf16, #tpu.memory_space<vmem>>, vector<4x16x128xbf16>
      tpu.vector_store %arg14[%c0_41, %c0_42, %c0_43], %55 {strides = array<i32>} : memref<4x16x128xbf16, #tpu.memory_space<vmem>>, vector<4x16x128xbf16>,
      %57 = arith.truncf %53 : vector<64x128xf32> to vector<64x128xbf16>
      %58 = vector.shape_cast %57 : vector<64x128xbf16> to vector<4x16x128xbf16>
      %c0_44 = arith.constant 0 : index
      %c0_45 = arith.constant 0 : index
      %c0_46 = arith.constant 0 : index
      %59 = vector.load %arg15[%c0_44, %c0_45, %c0_46] : memref<4x16x128xbf16, #tpu.memory_space<vmem>>, vector<4x16x128xbf16>
      tpu.vector_store %arg15[%c0_44, %c0_45, %c0_46], %58 {strides = array<i32>} : memref<4x16x128xbf16, #tpu.memory_space<vmem>>, vector<4x16x128xbf16>,
    } else {
    }
    %c0 = arith.constant 0 : index
    %c0_1 = arith.constant 0 : index
    %c0_2 = arith.constant 0 : index
    %3 = vector.load %arg2[%c0, %c0_1, %c0_2] : memref<1x64x128xf32, #tpu.memory_space<vmem>>, vector<1x64x128xf32>
    %4 = vector.shape_cast %3 : vector<1x64x128xf32> to vector<64x128xf32>
    %5 = arith.truncf %4 : vector<64x128xf32> to vector<64x128xbf16>
    %c0_3 = arith.constant 0 : index
    %c0_4 = arith.constant 0 : index
    %6 = vector.load %arg5[%c0_3, %c0_4] : memref<64x64xbf16, #tpu.memory_space<vmem>>, vector<64x64xbf16>
    %cst = arith.constant dense<0.000000e+00> : vector<64x128xf32>
    %7 = tpu.matmul %6, %5, %cst {dimension_numbers = #tpu.dot_dimension_numbers<[1], [0], [0], [1], [0, 0, 1, 1], [], []>} : vector<64x64xbf16>, vector<64x128xbf16>, vector<64x128xf32> -> vector<64x128xf32>
    %c0_5 = arith.constant 0 : index
    %c0_6 = arith.constant 0 : index
    %8 = vector.load %arg6[%c0_5, %c0_6] : memref<64x1xf32, #tpu.memory_space<vmem>>, vector<64x1xf32>
    %9 = vector.broadcast %8 : vector<64x1xf32> to vector<64x128xf32>
    %10 = arith.addf %7, %9 : vector<64x128xf32>
    %11 = arith.truncf %10 : vector<64x128xf32> to vector<64x128xbf16>
    %12 = vector.shape_cast %11 : vector<64x128xbf16> to vector<4x16x128xbf16>
    %c0_7 = arith.constant 0 : index
    %c0_8 = arith.constant 0 : index
    %c0_9 = arith.constant 0 : index
    %13 = vector.load %arg14[%c0_7, %c0_8, %c0_9] : memref<4x16x128xbf16, #tpu.memory_space<vmem>>, vector<4x16x128xbf16>
    %c0_10 = arith.constant 0 : index
    %c0_11 = arith.constant 0 : index
    %c0_12 = arith.constant 0 : index
    %14 = vector.load %arg15[%c0_10, %c0_11, %c0_12] : memref<4x16x128xbf16, #tpu.memory_space<vmem>>, vector<4x16x128xbf16>
    %cst_13 = arith.constant dense<0.000000e+00> : vector<4x128x128xf32>
    %15 = tpu.matmul %13, %12, %cst_13 {dimension_numbers = #tpu.dot_dimension_numbers<[1], [1], [2], [2], [0, 0, 0, 2, 1, 2], [0], [0]>} : vector<4x16x128xbf16>, vector<4x16x128xbf16>, vector<4x128x128xf32> -> vector<4x128x128xf32>
    %cst_14 = arith.constant dense<0xFF800000> : vector<4x128xf32>
    %16 = vector.multi_reduction <maximumf>, %15, %cst_14 [1] : vector<4x128x128xf32> to vector<4x128xf32>
    %17 = vector.shape_cast %16 : vector<4x128xf32> to vector<4x1x128xf32>
    %18 = vector.broadcast %17 : vector<4x1x128xf32> to vector<4x128x128xf32>
    %19 = arith.subf %15, %18 : vector<4x128x128xf32>
    %20 = math.exp %19 : vector<4x128x128xf32>
    %cst_15 = arith.constant dense<0.000000e+00> : vector<4x128xf32>
    %21 = vector.multi_reduction <add>, %20, %cst_15 [1] : vector<4x128x128xf32> to vector<4x128xf32>
    %22 = vector.shape_cast %21 : vector<4x128xf32> to vector<4x1x128xf32>
    %23 = tpu.reciprocal %22 {approx = true} : vector<4x1x128xf32> -> vector<4x1x128xf32>
    %24 = vector.broadcast %23 : vector<4x1x128xf32> to vector<4x128x128xf32>
    %25 = arith.mulf %20, %24 : vector<4x128x128xf32>
    %26 = arith.truncf %25 : vector<4x128x128xf32> to vector<4x128x128xbf16>
    %cst_16 = arith.constant dense<0.000000e+00> : vector<4x16x128xf32>
    %27 = tpu.matmul %14, %26, %cst_16 {dimension_numbers = #tpu.dot_dimension_numbers<[2], [1], [1], [2], [0, 0, 0, 1, 1, 2], [0], [0]>} : vector<4x16x128xbf16>, vector<4x128x128xbf16>, vector<4x16x128xf32> -> vector<4x16x128xf32>
    %28 = vector.shape_cast %27 : vector<4x16x128xf32> to vector<64x128xf32>
    %29 = arith.truncf %28 : vector<64x128xf32> to vector<64x128xbf16>
    %c0_17 = arith.constant 0 : index
    %c0_18 = arith.constant 0 : index
    %30 = vector.load %arg11[%c0_17, %c0_18] : memref<64x64xbf16, #tpu.memory_space<vmem>>, vector<64x64xbf16>
    %cst_19 = arith.constant dense<0.000000e+00> : vector<64x128xf32>
    %31 = tpu.matmul %30, %29, %cst_19 {dimension_numbers = #tpu.dot_dimension_numbers<[1], [0], [0], [1], [0, 0, 1, 1], [], []>} : vector<64x64xbf16>, vector<64x128xbf16>, vector<64x128xf32> -> vector<64x128xf32>
    %c0_20 = arith.constant 0 : index
    %c0_21 = arith.constant 0 : index
    %32 = vector.load %arg12[%c0_20, %c0_21] : memref<64x1xf32, #tpu.memory_space<vmem>>, vector<64x1xf32>
    %33 = vector.broadcast %32 : vector<64x1xf32> to vector<64x128xf32>
    %34 = arith.addf %31, %33 : vector<64x128xf32>
    %c0_22 = arith.constant 0 : index
    %c0_23 = arith.constant 0 : index
    %c0_24 = arith.constant 0 : index
    %35 = vector.load %arg13[%c0_22, %c0_23, %c0_24] : memref<1x64x128xf32, #tpu.memory_space<vmem>>, vector<1x64x128xf32>
    %36 = vector.shape_cast %35 : vector<1x64x128xf32> to vector<64x128xf32>
    %37 = vector.shape_cast %34 : vector<64x128xf32> to vector<1x64x128xf32>
    tpu.vector_store %arg13[%c0_22, %c0_23, %c0_24], %37 {strides = array<i32>} : memref<1x64x128xf32, #tpu.memory_space<vmem>>, vector<1x64x128xf32>,
    return
  }
  func.func @transform_0(%arg0: i32, %arg1: i32) -> (i32, i32, i32) {
    %c0_i32 = arith.constant 0 : i32
    %c0_i32_0 = arith.constant 0 : i32
    return %arg0, %c0_i32, %arg1 : i32, i32, i32
  }
  func.func @transform_1(%arg0: i32, %arg1: i32) -> (i32, i32, i32) {
    %c0_i32 = arith.constant 0 : i32
    %c0_i32_0 = arith.constant 0 : i32
    %c0_i32_1 = arith.constant 0 : i32
    return %arg0, %c0_i32, %c0_i32_0 : i32, i32, i32
  }
  func.func @transform_2(%arg0: i32, %arg1: i32) -> (i32, i32, i32) {
    %c0_i32 = arith.constant 0 : i32
    %c0_i32_0 = arith.constant 0 : i32
    %c0_i32_1 = arith.constant 0 : i32
    return %arg0, %c0_i32, %c0_i32_0 : i32, i32, i32
  }
  func.func @transform_3(%arg0: i32, %arg1: i32) -> (i32, i32) {
    %c0_i32 = arith.constant 0 : i32
    %c0_i32_0 = arith.constant 0 : i32
    %c0_i32_1 = arith.constant 0 : i32
    return %c0_i32, %c0_i32_0 : i32, i32
  }
  func.func @transform_4(%arg0: i32, %arg1: i32) -> (i32, i32) {
    %c0_i32 = arith.constant 0 : i32
    %c0_i32_0 = arith.constant 0 : i32
    %c0_i32_1 = arith.constant 0 : i32
    return %c0_i32, %c0_i32_0 : i32, i32
  }
  func.func @transform_5(%arg0: i32, %arg1: i32) -> (i32, i32) {
    %c0_i32 = arith.constant 0 : i32
    %c0_i32_0 = arith.constant 0 : i32
    %c0_i32_1 = arith.constant 0 : i32
    return %c0_i32, %c0_i32_0 : i32, i32
  }
  func.func @transform_6(%arg0: i32, %arg1: i32) -> (i32, i32) {
    %c0_i32 = arith.constant 0 : i32
    %c0_i32_0 = arith.constant 0 : i32
    %c0_i32_1 = arith.constant 0 : i32
    return %c0_i32, %c0_i32_0 : i32, i32
  }
  func.func @transform_7(%arg0: i32, %arg1: i32) -> (i32, i32) {
    %c0_i32 = arith.constant 0 : i32
    %c0_i32_0 = arith.constant 0 : i32
    %c0_i32_1 = arith.constant 0 : i32
    return %c0_i32, %c0_i32_0 : i32, i32
  }
  func.func @transform_8(%arg0: i32, %arg1: i32) -> (i32, i32) {
    %c0_i32 = arith.constant 0 : i32
    %c0_i32_0 = arith.constant 0 : i32
    %c0_i32_1 = arith.constant 0 : i32
    return %c0_i32, %c0_i32_0 : i32, i32
  }
  func.func @transform_9(%arg0: i32, %arg1: i32) -> (i32, i32) {
    %c0_i32 = arith.constant 0 : i32
    %c0_i32_0 = arith.constant 0 : i32
    %c0_i32_1 = arith.constant 0 : i32
    return %c0_i32, %c0_i32_0 : i32, i32
  }
  func.func @transform_10(%arg0: i32, %arg1: i32) -> (i32, i32) {
    %c0_i32 = arith.constant 0 : i32
    %c0_i32_0 = arith.constant 0 : i32
    %c0_i32_1 = arith.constant 0 : i32
    return %c0_i32, %c0_i32_0 : i32, i32
  }
  func.func @transform_11(%arg0: i32, %arg1: i32) -> (i32, i32, i32) {
    %c0_i32 = arith.constant 0 : i32
    %c0_i32_0 = arith.constant 0 : i32
    return %arg0, %c0_i32, %arg1 : i32, i32, i32
  }
}

</mosaic_0001>

<llo_original>
// kernel: tpu_custom_call.1
$region0: #{tpu_custom_call.1}
  #allocation0 [shape = 'u32[]', space=smem, size = 0x4, offset = 0x4, fixed_abs, tag = 'smem constant byte address 0x4 - core index']
  #allocation1 [shape = 'u32[144,128]{1,0:T(1,128)}', space=vmem, size = 0x12000, scoped, tag = 'internal scratch']
  #allocation2 [shape = 'bf16[4,16,128]{2,1,0:T(16,128)(2,1)}', space=vmem, size = 0x4000, scoped, tag = 'scratch operand']
  #allocation3 [shape = 'bf16[4,16,128]{2,1,0:T(16,128)(2,1)}', space=vmem, size = 0x4000, scoped, tag = 'scratch operand']
  %s0 = inlined_call_operand.vmem [shape: f32[2,64,256], index: 0, kind: input, shape index: {}]
  %s1 = inlined_call_operand.hbm [shape: f32[2,64,128], index: 1, kind: input, shape index: {}]
  %s2 = inlined_call_operand.hbm [shape: f32[2,64,128], index: 2, kind: input, shape index: {}]
  %s3 = inlined_call_operand.hbm [shape: bf16[64,64], index: 3, kind: input, shape index: {}]
  %s4 = inlined_call_operand.vmem [shape: f32[64,1], index: 4, kind: input, shape index: {}]
  %s5 = inlined_call_operand.hbm [shape: bf16[64,64], index: 5, kind: input, shape index: {}]
  %s6 = inlined_call_operand.vmem [shape: f32[64,1], index: 6, kind: input, shape index: {}]
  %s7 = inlined_call_operand.hbm [shape: bf16[64,64], index: 7, kind: input, shape index: {}]
  %s8 = inlined_call_operand.vmem [shape: f32[64,1], index: 8, kind: input, shape index: {}]
  %s9 = inlined_call_operand.vmem [shape: bf16[64,64], index: 9, kind: input, shape index: {}]
  %s10 = inlined_call_operand.vmem [shape: f32[64,1], index: 10, kind: input, shape index: {}]
  %s11 = inlined_call_operand.hbm [shape: f32[2,64,256], index: 11, kind: output, shape index: {}]
  %s12 = sld [smem:[#allocation0]]
  $region139: #{tpu_custom_call.1} parent=0
    _
  %s14 = ssub.s32 1, %s12
  %s15 = scalar_select 0, %s14, %s12
  $region1: #{tpu_custom_call.1} parent=0
    #allocation4 [shape = 'u8[65536]{0}', space=vmem, size = 0x10000, scoped, tag = 'input window, operand 0']
    #allocation5 [shape = 'u8[65536]{0}', space=vmem, size = 0x10000, scoped, tag = 'input window, operand 1']
    #allocation6 [shape = 's32[2]{0}', space=sflag, size = 0x8, scoped, tag = 'scoped memory for tpu_custom_call.1']
    #allocation7 [shape = 's32[2]{0}', space=sflag, size = 0x8, scoped, tag = 'scoped memory for tpu_custom_call.1']
    #allocation8 [shape = 'u8[65536]{0}', space=vmem, size = 0x10000, scoped, tag = 'input window, operand 2']
    #allocation9 [shape = 's32[2]{0}', space=sflag, size = 0x8, scoped, tag = 'scoped memory for tpu_custom_call.1']
    #allocation10 [shape = 'u8[16384]{0}', space=vmem, size = 0x4000, scoped, tag = 'input window, operand 3, single buffered']
    #allocation11 [shape = 'u8[16384]{0}', space=vmem, size = 0x4000, scoped, tag = 'input window, operand 5, single buffered']
    #allocation12 [shape = 's32[1]{0}', space=sflag, size = 0x4, scoped, tag = 'scoped memory for tpu_custom_call.1']
    #allocation13 [shape = 'u8[16384]{0}', space=vmem, size = 0x4000, scoped, tag = 'input window, operand 7, single buffered']
    #allocation14 [shape = 'u8[65536]{0}', space=vmem, size = 0x10000, scoped, tag = 'output window, operand 0']
    %16 = vsyncpa [#allocation6], 0
    %s17 = scalar_lea.sflag [#allocation6], 1
    %18 = vsyncpa %s17, 0
    %19 = vsyncpa [#allocation9], 0
    %s20 = scalar_lea.sflag [#allocation9], 1
    %21 = vsyncpa %s20, 0
    %22 = vsyncpa [#allocation12], 0
    %23 = vsyncpa [#allocation7], 0
    %s24 = scalar_lea.sflag [#allocation7], 1
    %25 = vsyncpa %s24, 0
    loop: start=0, step=1, limit=6
    $region2: #{tpu_custom_call.1} parent=1 // loop_pre_header
      _
    $region3: #{tpu_custom_call.1} parent=1 // loop_header
      %s27 = sphi 0, %s31
      %p28 = scmp.ge.s32.totalorder %s27, 6
      %s34 = sphi 0, %s46
      %s35 = sphi 0, %s42
      %s36 = sphi 0, %s34
      %s37 = sphi 0, %s35
      %s38 = sphi 0, %s36
      %s39 = sphi 0, %s37
      %s51 = sphi 0, %s53
      %s54 = sphi 0, %s51
      %s55 = sphi 0, %s54
      %s71 = sphi 0, %s55
      %s77 = sphi 0, %s79
      %s80 = sphi 0, %s77
      %s81 = sphi 0, %s80
      %s97 = sphi 0, %s81
      %s103 = sphi 0, %s105
      %s106 = sphi 0, %s103
      %s107 = sphi 0, %s106
      %s123 = sphi 0, %s107
      %s127 = sphi 0, %s127
      %s129 = sphi 0, %s127
      %s130 = sphi 0, %s129
      %s144 = sphi 0, %s130
      %s148 = sphi 0, %s148
      %s150 = sphi 0, %s148
      %s151 = sphi 0, %s150
      %s165 = sphi 0, %s151
      %s169 = sphi 0, %s169
      %s171 = sphi 0, %s169
      %s172 = sphi 0, %s171
      %s186 = sphi 0, %s172
      %s190 = sphi 0, %s190
      %s192 = sphi 0, %s190
      %s193 = sphi 0, %s192
      %s207 = sphi 0, %s193
      %s211 = sphi 0, %s211
      %s213 = sphi 0, %s211
      %s214 = sphi 0, %s213
      %s228 = sphi 0, %s214
      %s232 = sphi 0, %s232
      %s234 = sphi 0, %s232
      %s235 = sphi 0, %s234
      %s249 = sphi 0, %s235
      %s253 = sphi 0, %s253
      %s255 = sphi 0, %s253
      %s256 = sphi 0, %s255
      %s270 = sphi 0, %s256
      %s274 = sphi 0, %s274
      %s276 = sphi 0, %s274
      %s277 = sphi 0, %s276
      %s291 = sphi 0, %s277
      %s299 = sphi 0, %s301
      %s302 = sphi 0, %s299
      %s303 = sphi 0, %s302
      %s319 = sphi 0, %s303
    $region4: #{tpu_custom_call.1} parent=1 // loop_header_branch
      %30 = sbr.rel (%p28) target = $region8
    $region5: #{tpu_custom_call.1} parent=1 // loop_body
      %s32 = ssub.s32 %s27, 1
      %s33 = ssub.s32 %s27, 2
      %s40 = sadd.s32 1, %s35
      %p41 = scmp.ge.s32.totalorder %s40, 2
      %s42 = scalar_select %p41, 0, %s40
      %s43 = sadd.s32 1, %s34
      %s44 = scalar_select %p41, %s43, %s34
      %p45 = scmp.ge.s32.totalorder %s44, 2
      %s46 = scalar_select %p45, 0, %s44
      %s47 = ssub.s32 %s34, %s46
      %s48 = ssub.s32 %s35, %s42
      %s49 = sor.u32 %s47, %s48
      %p50 = scmp.eq.s32.totalorder %s49, 0
      %s52 = sadd.s32 %s51, 1
      %s53 = scalar_select %p50, %s51, %s52
      %p56 = pneg %p50
      %p57 = scmp.eq.s32.totalorder %s27, 3
      %p58 = por %p56, %p57
      %p59 = scmp.ne.s32.totalorder %s51, %s54
      %p60 = scmp.eq.s32.totalorder %s27, 0
      %p61 = por %p59, %p60
      %p62 = scmp.ne.s32.totalorder %s51, %s54
      %p63 = scmp.eq.s32.totalorder %s32, 3
      %p64 = por %p62, %p63
      %p65 = scmp.ne.s32.totalorder %s54, %s55
      %p66 = scmp.eq.s32.totalorder %s32, 0
      %p67 = por %p65, %p66
      %p68 = scmp.ne.s32.totalorder %s54, %s55
      %p69 = scmp.eq.s32.totalorder %s33, 3
      %p70 = por %p68, %p69
      %p72 = scmp.ne.s32.totalorder %s55, %s71
      %p73 = scmp.eq.s32.totalorder %s33, 0
      %p74 = por %p72, %p73
      %s75 = ssub.s32 %s34, %s46
      %p76 = scmp.eq.s32.totalorder %s75, 0
      %s78 = sadd.s32 %s77, 1
      %s79 = scalar_select %p76, %s77, %s78
      %p82 = pneg %p76
      %p83 = scmp.eq.s32.totalorder %s27, 3
      %p84 = por %p82, %p83
      %p85 = scmp.ne.s32.totalorder %s77, %s80
      %p86 = scmp.eq.s32.totalorder %s27, 0
      %p87 = por %p85, %p86
      %p88 = scmp.ne.s32.totalorder %s77, %s80
      %p89 = scmp.eq.s32.totalorder %s32, 3
      %p90 = por %p88, %p89
      %p91 = scmp.ne.s32.totalorder %s80, %s81
      %p92 = scmp.eq.s32.totalorder %s32, 0
      %p93 = por %p91, %p92
      %p94 = scmp.ne.s32.totalorder %s80, %s81
      %p95 = scmp.eq.s32.totalorder %s33, 3
      %p96 = por %p94, %p95
      %p98 = scmp.ne.s32.totalorder %s81, %s97
      %p99 = scmp.eq.s32.totalorder %s33, 0
      %p100 = por %p98, %p99
      %s101 = ssub.s32 %s34, %s46
      %p102 = scmp.eq.s32.totalorder %s101, 0
      %s104 = sadd.s32 %s103, 1
      %s105 = scalar_select %p102, %s103, %s104
      %p108 = pneg %p102
      %p109 = scmp.eq.s32.totalorder %s27, 3
      %p110 = por %p108, %p109
      %p111 = scmp.ne.s32.totalorder %s103, %s106
      %p112 = scmp.eq.s32.totalorder %s27, 0
      %p113 = por %p111, %p112
      %p114 = scmp.ne.s32.totalorder %s103, %s106
      %p115 = scmp.eq.s32.totalorder %s32, 3
      %p116 = por %p114, %p115
      %p117 = scmp.ne.s32.totalorder %s106, %s107
      %p118 = scmp.eq.s32.totalorder %s32, 0
      %p119 = por %p117, %p118
      %p120 = scmp.ne.s32.totalorder %s106, %s107
      %p121 = scmp.eq.s32.totalorder %s33, 3
      %p122 = por %p120, %p121
      %p124 = scmp.ne.s32.totalorder %s107, %s123
      %p125 = scmp.eq.s32.totalorder %s33, 0
      %p126 = por %p124, %p125
      %s128 = sadd.s32 %s127, 1
      %p131 = scmp.eq.s32.totalorder %s27, 3
      %p132 = scmp.ne.s32.totalorder %s127, %s129
      %p133 = scmp.eq.s32.totalorder %s27, 0
      %p134 = por %p132, %p133
      %p135 = scmp.ne.s32.totalorder %s127, %s129
      %p136 = scmp.eq.s32.totalorder %s32, 3
      %p137 = por %p135, %p136
      %p138 = scmp.ne.s32.totalorder %s129, %s130
      %p139 = scmp.eq.s32.totalorder %s32, 0
      %p140 = por %p138, %p139
      %p141 = scmp.ne.s32.totalorder %s129, %s130
      %p142 = scmp.eq.s32.totalorder %s33, 3
      %p143 = por %p141, %p142
      %p145 = scmp.ne.s32.totalorder %s130, %s144
      %p146 = scmp.eq.s32.totalorder %s33, 0
      %p147 = por %p145, %p146
      %s149 = sadd.s32 %s148, 1
      %p152 = scmp.eq.s32.totalorder %s27, 3
      %p153 = scmp.ne.s32.totalorder %s148, %s150
      %p154 = scmp.eq.s32.totalorder %s27, 0
      %p155 = por %p153, %p154
      %p156 = scmp.ne.s32.totalorder %s148, %s150
      %p157 = scmp.eq.s32.totalorder %s32, 3
      %p158 = por %p156, %p157
      %p159 = scmp.ne.s32.totalorder %s150, %s151
      %p160 = scmp.eq.s32.totalorder %s32, 0
      %p161 = por %p159, %p160
      %p162 = scmp.ne.s32.totalorder %s150, %s151
      %p163 = scmp.eq.s32.totalorder %s33, 3
      %p164 = por %p162, %p163
      %p166 = scmp.ne.s32.totalorder %s151, %s165
      %p167 = scmp.eq.s32.totalorder %s33, 0
      %p168 = por %p166, %p167
      %s170 = sadd.s32 %s169, 1
      %p173 = scmp.eq.s32.totalorder %s27, 3
      %p174 = scmp.ne.s32.totalorder %s169, %s171
      %p175 = scmp.eq.s32.totalorder %s27, 0
      %p176 = por %p174, %p175
      %p177 = scmp.ne.s32.totalorder %s169, %s171
      %p178 = scmp.eq.s32.totalorder %s32, 3
      %p179 = por %p177, %p178
      %p180 = scmp.ne.s32.totalorder %s171, %s172
      %p181 = scmp.eq.s32.totalorder %s32, 0
      %p182 = por %p180, %p181
      %p183 = scmp.ne.s32.totalorder %s171, %s172
      %p184 = scmp.eq.s32.totalorder %s33, 3
      %p185 = por %p183, %p184
      %p187 = scmp.ne.s32.totalorder %s172, %s186
      %p188 = scmp.eq.s32.totalorder %s33, 0
      %p189 = por %p187, %p188
      %s191 = sadd.s32 %s190, 1
      %p194 = scmp.eq.s32.totalorder %s27, 3
      %p195 = scmp.ne.s32.totalorder %s190, %s192
      %p196 = scmp.eq.s32.totalorder %s27, 0
      %p197 = por %p195, %p196
      %p198 = scmp.ne.s32.totalorder %s190, %s192
      %p199 = scmp.eq.s32.totalorder %s32, 3
      %p200 = por %p198, %p199
      %p201 = scmp.ne.s32.totalorder %s192, %s193
      %p202 = scmp.eq.s32.totalorder %s32, 0
      %p203 = por %p201, %p202
      %p204 = scmp.ne.s32.totalorder %s192, %s193
      %p205 = scmp.eq.s32.totalorder %s33, 3
      %p206 = por %p204, %p205
      %p208 = scmp.ne.s32.totalorder %s193, %s207
      %p209 = scmp.eq.s32.totalorder %s33, 0
      %p210 = por %p208, %p209
      %s212 = sadd.s32 %s211, 1
      %p215 = scmp.eq.s32.totalorder %s27, 3
      %p216 = scmp.ne.s32.totalorder %s211, %s213
      %p217 = scmp.eq.s32.totalorder %s27, 0
      %p218 = por %p216, %p217
      %p219 = scmp.ne.s32.totalorder %s211, %s213
      %p220 = scmp.eq.s32.totalorder %s32, 3
      %p221 = por %p219, %p220
      %p222 = scmp.ne.s32.totalorder %s213, %s214
      %p223 = scmp.eq.s32.totalorder %s32, 0
      %p224 = por %p222, %p223
      %p225 = scmp.ne.s32.totalorder %s213, %s214
      %p226 = scmp.eq.s32.totalorder %s33, 3
      %p227 = por %p225, %p226
      %p229 = scmp.ne.s32.totalorder %s214, %s228
      %p230 = scmp.eq.s32.totalorder %s33, 0
      %p231 = por %p229, %p230
      %s233 = sadd.s32 %s232, 1
      %p236 = scmp.eq.s32.totalorder %s27, 3
      %p237 = scmp.ne.s32.totalorder %s232, %s234
      %p238 = scmp.eq.s32.totalorder %s27, 0
      %p239 = por %p237, %p238
      %p240 = scmp.ne.s32.totalorder %s232, %s234
      %p241 = scmp.eq.s32.totalorder %s32, 3
      %p242 = por %p240, %p241
      %p243 = scmp.ne.s32.totalorder %s234, %s235
      %p244 = scmp.eq.s32.totalorder %s32, 0
      %p245 = por %p243, %p244
      %p246 = scmp.ne.s32.totalorder %s234, %s235
      %p247 = scmp.eq.s32.totalorder %s33, 3
      %p248 = por %p246, %p247
      %p250 = scmp.ne.s32.totalorder %s235, %s249
      %p251 = scmp.eq.s32.totalorder %s33, 0
      %p252 = por %p250, %p251
      %s254 = sadd.s32 %s253, 1
      %p257 = scmp.eq.s32.totalorder %s27, 3
      %p258 = scmp.ne.s32.totalorder %s253, %s255
      %p259 = scmp.eq.s32.totalorder %s27, 0
      %p260 = por %p258, %p259
      %p261 = scmp.ne.s32.totalorder %s253, %s255
      %p262 = scmp.eq.s32.totalorder %s32, 3
      %p263 = por %p261, %p262
      %p264 = scmp.ne.s32.totalorder %s255, %s256
      %p265 = scmp.eq.s32.totalorder %s32, 0
      %p266 = por %p264, %p265
      %p267 = scmp.ne.s32.totalorder %s255, %s256
      %p268 = scmp.eq.s32.totalorder %s33, 3
      %p269 = por %p267, %p268
      %p271 = scmp.ne.s32.totalorder %s256, %s270
      %p272 = scmp.eq.s32.totalorder %s33, 0
      %p273 = por %p271, %p272
      %s275 = sadd.s32 %s274, 1
      %p278 = scmp.eq.s32.totalorder %s27, 3
      %p279 = scmp.ne.s32.totalorder %s274, %s276
      %p280 = scmp.eq.s32.totalorder %s27, 0
      %p281 = por %p279, %p280
      %p282 = scmp.ne.s32.totalorder %s274, %s276
      %p283 = scmp.eq.s32.totalorder %s32, 3
      %p284 = por %p282, %p283
      %p285 = scmp.ne.s32.totalorder %s276, %s277
      %p286 = scmp.eq.s32.totalorder %s32, 0
      %p287 = por %p285, %p286
      %p288 = scmp.ne.s32.totalorder %s276, %s277
      %p289 = scmp.eq.s32.totalorder %s33, 3
      %p290 = por %p288, %p289
      %p292 = scmp.ne.s32.totalorder %s277, %s291
      %p293 = scmp.eq.s32.totalorder %s33, 0
      %p294 = por %p292, %p293
      %s295 = ssub.s32 %s34, %s46
      %s296 = ssub.s32 %s35, %s42
      %s297 = sor.u32 %s295, %s296
      %p298 = scmp.eq.s32.totalorder %s297, 0
      %s300 = sadd.s32 %s299, 1
      %s301 = scalar_select %p298, %s299, %s300
      %p304 = pneg %p298
      %p305 = scmp.eq.s32.totalorder %s27, 3
      %p306 = por %p304, %p305
      %p307 = scmp.ne.s32.totalorder %s299, %s302
      %p308 = scmp.eq.s32.totalorder %s27, 0
      %p309 = por %p307, %p308
      %p310 = scmp.ne.s32.totalorder %s299, %s302
      %p311 = scmp.eq.s32.totalorder %s32, 3
      %p312 = por %p310, %p311
      %p313 = scmp.ne.s32.totalorder %s302, %s303
      %p314 = scmp.eq.s32.totalorder %s32, 0
      %p315 = por %p313, %p314
      %p316 = scmp.ne.s32.totalorder %s302, %s303
      %p317 = scmp.eq.s32.totalorder %s33, 3
      %p318 = por %p316, %p317
      %p320 = scmp.ne.s32.totalorder %s303, %s319
      %p321 = scmp.eq.s32.totalorder %s33, 0
      %p322 = por %p320, %p321
      %p323 = scmp.le.s32.totalorder 1, %s27
      %p324 = scmp.lt.s32.totalorder %s27, 5
      %p325 = pnand %p323, %p324
      %p326 = pneg %p325
      // Predicated region
      $region9: #{tpu_custom_call.1} parent=5 // pred_check
        _
      $region10: #{tpu_custom_call.1} parent=5 // pred_check_branch
        %328 = sbr.rel (%p325) target = $region12
      $region11: #{tpu_custom_call.1} parent=5 // pred_region
        %s329 = ssub.s32 %s27, 1
        // Predicated region
        $region13: #{tpu_custom_call.1} parent=11 // pred_check
          %p330 = pneg %p140
        $region14: #{tpu_custom_call.1} parent=11 // pred_check_branch
          %332 = sbr.rel (%p330) target = $region16
        $region15: #{tpu_custom_call.1} parent=11 // pred_region
          %s334 = ssub.s32 512, 512
          %335 = vsyncadd [#allocation9], %s334
          %s336 = sshll.u32 [#allocation10], 4
          %s337 = int_to_ptr.vmem [resolvable:$true] %s336
          %342 = dma.hbm_to_vmem [thread:$0]  %s3, 512, %s337, [#allocation9], 64, 64, 4
        $region16: #{tpu_custom_call.1} parent=11 // pred_fallthru
          _
        // Predicated region
        $region17: #{tpu_custom_call.1} parent=11 // pred_check
          %p343 = pneg %p161
        $region18: #{tpu_custom_call.1} parent=11 // pred_check_branch
          %345 = sbr.rel (%p343) target = $region20
        $region19: #{tpu_custom_call.1} parent=11 // pred_region
          _
        $region20: #{tpu_custom_call.1} parent=11 // pred_fallthru
          _
        // Predicated region
        $region21: #{tpu_custom_call.1} parent=11 // pred_check
          %p346 = pneg %p182
        $region22: #{tpu_custom_call.1} parent=11 // pred_check_branch
          %348 = sbr.rel (%p346) target = $region24
        $region23: #{tpu_custom_call.1} parent=11 // pred_region
          %s350 = ssub.s32 512, 512
          %351 = vsyncadd [#allocation12], %s350
          %s352 = sshll.u32 [#allocation11], 4
          %s353 = int_to_ptr.vmem [resolvable:$true] %s352
          %358 = dma.hbm_to_vmem [thread:$0]  %s5, 512, %s353, [#allocation12], 64, 64, 4
        $region24: #{tpu_custom_call.1} parent=11 // pred_fallthru
          _
        // Predicated region
        $region25: #{tpu_custom_call.1} parent=11 // pred_check
          %p359 = pneg %p203
        $region26: #{tpu_custom_call.1} parent=11 // pred_check_branch
          %361 = sbr.rel (%p359) target = $region28
        $region27: #{tpu_custom_call.1} parent=11 // pred_region
          _
        $region28: #{tpu_custom_call.1} parent=11 // pred_fallthru
          _
        // Predicated region
        $region29: #{tpu_custom_call.1} parent=11 // pred_check
          %p362 = pneg %p224
        $region30: #{tpu_custom_call.1} parent=11 // pred_check_branch
          %364 = sbr.rel (%p362) target = $region32
        $region31: #{tpu_custom_call.1} parent=11 // pred_region
          %s366 = ssub.s32 512, 512
          %367 = vsyncadd [#allocation12], %s366
          %s368 = sshll.u32 [#allocation13], 4
          %s369 = int_to_ptr.vmem [resolvable:$true] %s368
          %374 = dma.hbm_to_vmem [thread:$0]  %s7, 512, %s369, [#allocation12], 64, 64, 4
        $region32: #{tpu_custom_call.1} parent=11 // pred_fallthru
          _
        // Predicated region
        $region33: #{tpu_custom_call.1} parent=11 // pred_check
          %p375 = pneg %p245
        $region34: #{tpu_custom_call.1} parent=11 // pred_check_branch
          %377 = sbr.rel (%p375) target = $region36
        $region35: #{tpu_custom_call.1} parent=11 // pred_region
          _
        $region36: #{tpu_custom_call.1} parent=11 // pred_fallthru
          _
        // Predicated region
        $region37: #{tpu_custom_call.1} parent=11 // pred_check
          %p378 = pneg %p266
        $region38: #{tpu_custom_call.1} parent=11 // pred_check_branch
          %380 = sbr.rel (%p378) target = $region40
        $region39: #{tpu_custom_call.1} parent=11 // pred_region
          _
        $region40: #{tpu_custom_call.1} parent=11 // pred_fallthru
          _
        // Predicated region
        $region41: #{tpu_custom_call.1} parent=11 // pred_check
          %p381 = pneg %p287
        $region42: #{tpu_custom_call.1} parent=11 // pred_check_branch
          %383 = sbr.rel (%p381) target = $region44
        $region43: #{tpu_custom_call.1} parent=11 // pred_region
          _
        $region44: #{tpu_custom_call.1} parent=11 // pred_fallthru
          _
      $region12: #{tpu_custom_call.1} parent=5 // pred_fallthru
        _
      %p384 = scmp.lt.s32.totalorder %s27, 4
      // Predicated region
      $region45: #{tpu_custom_call.1} parent=5 // pred_check
        %p385 = pneg %p384
      $region46: #{tpu_custom_call.1} parent=5 // pred_check_branch
        %387 = sbr.rel (%p385) target = $region48
      $region47: #{tpu_custom_call.1} parent=5 // pred_region
        // Predicated region
        $region49: #{tpu_custom_call.1} parent=47 // pred_check
          %p388 = pneg %p61
        $region50: #{tpu_custom_call.1} parent=47 // pred_check_branch
          %390 = sbr.rel (%p388) target = $region52
        $region51: #{tpu_custom_call.1} parent=47 // pred_region
          %s391 = sand.u32 %s51, 1
          %s392 = sand.u32 %s51, 1
          %s393 = smul.addr %s392, 64
          %s394 = scalar_lea.vmem [#allocation4], %s393
          %s395 = smul.addr %s34, 16
          %s396 = sadd.s32 %s35, %s395
          %s397 = smul.addr %s396, 8
          %s398 = scalar_lea.vmem %s0, %s397
          // Predicated region
          $region53: #{tpu_custom_call.1} parent=51 // pred_check
            _
          $region54: #{tpu_custom_call.1} parent=51 // pred_check_branch
            %400 = sbr.rel (0) target = $region56
          $region55: #{tpu_custom_call.1} parent=51 // pred_region
            // Predicated region
            $region57: #{tpu_custom_call.1} parent=55 // pred_check
              _
            $region58: #{tpu_custom_call.1} parent=55 // pred_check_branch
              %402 = sbr.rel (0) target = $region60
            $region59: #{tpu_custom_call.1} parent=55 // pred_region
              // Predicated region
              $region72: #{tpu_custom_call.1} parent=59 // pred_check
                _
              $region73: #{tpu_custom_call.1} parent=59 // pred_check_branch
                %431 = sbr.rel (0) target = $region75
              $region74: #{tpu_custom_call.1} parent=59 // pred_region
                loop: start=0, step=1, limit=1
                $region76: #{tpu_custom_call.1} parent=74 // loop_pre_header
                  _
                $region77: #{tpu_custom_call.1} parent=74 // loop_header
                  %s433 = sphi 0, %s437
                  %p434 = scmp.ge.s32.totalorder %s433, 1
                  %s438 = sphi %s398, %s398
                  %s439 = sphi %s394, %s394
                $region78: #{tpu_custom_call.1} parent=74 // loop_header_branch
                  %436 = sbr.rel (%p434) target = $region82
                $region79: #{tpu_custom_call.1} parent=74 // loop_body
                  %v440 = vld [vmem:[%s438] sm:$0xff]
                  %441 = vst [vmem:[%s439] sm:$0xff] %v440
                  %v442 = vld [vmem:[%s438 + $0x10] sm:$0xff]
                  %443 = vst [vmem:[%s439 + $0x8] sm:$0xff] %v442
                  %v444 = vld [vmem:[%s438 + $0x20] sm:$0xff]
                  %445 = vst [vmem:[%s439 + $0x10] sm:$0xff] %v444
                  %v446 = vld [vmem:[%s438 + $0x30] sm:$0xff]
                  %447 = vst [vmem:[%s439 + $0x18] sm:$0xff] %v446
                  %v448 = vld [vmem:[%s438 + $0x40] sm:$0xff]
                  %449 = vst [vmem:[%s439 + $0x20] sm:$0xff] %v448
                  %v450 = vld [vmem:[%s438 + $0x50] sm:$0xff]
                  %451 = vst [vmem:[%s439 + $0x28] sm:$0xff] %v450
                  %v452 = vld [vmem:[%s438 + $0x60] sm:$0xff]
                  %453 = vst [vmem:[%s439 + $0x30] sm:$0xff] %v452
                  %v454 = vld [vmem:[%s438 + $0x70] sm:$0xff]
                  %455 = vst [vmem:[%s439 + $0x38] sm:$0xff] %v454
                $region80: #{tpu_custom_call.1} parent=74 // loop_footer
                  %s437 = sadd.s32 1, %s433
                $region81: #{tpu_custom_call.1} parent=74 // loop_footer_branch
                  %432 = sbr.rel target = $region77
                $region82: #{tpu_custom_call.1} parent=74 // loop_exit
                  _
              $region75: #{tpu_custom_call.1} parent=59 // pred_fallthru
                _
              // Predicated region
              $region83: #{tpu_custom_call.1} parent=59 // pred_check
                _
              $region84: #{tpu_custom_call.1} parent=59 // pred_check_branch
                %457 = sbr.rel target = $region86
              $region85: #{tpu_custom_call.1} parent=59 // pred_region
                _
              $region86: #{tpu_custom_call.1} parent=59 // pred_fallthru
                _
            $region60: #{tpu_custom_call.1} parent=55 // pred_fallthru
              _
            // Predicated region
            $region61: #{tpu_custom_call.1} parent=55 // pred_check
              _
            $region62: #{tpu_custom_call.1} parent=55 // pred_check_branch
              %404 = sbr.rel target = $region64
            $region63: #{tpu_custom_call.1} parent=55 // pred_region
              loop: start=0, step=1, limit=1
              $region65: #{tpu_custom_call.1} parent=63 // loop_pre_header
                _
              $region66: #{tpu_custom_call.1} parent=63 // loop_header
                %s407 = sphi 0, %s411
                %p408 = scmp.ge.s32.totalorder %s407, 1
                %s412 = sphi %s398, %s398
                %s413 = sphi %s394, %s394
              $region67: #{tpu_custom_call.1} parent=63 // loop_header_branch
                %410 = sbr.rel (%p408) target = $region71
              $region68: #{tpu_custom_call.1} parent=63 // loop_body
                %v414 = vld [vmem:[%s412] sm:$0xff]
                %415 = vst [vmem:[%s413] sm:$0xff] %v414
                %v416 = vld [vmem:[%s412 + $0x10] sm:$0xff]
                %417 = vst [vmem:[%s413 + $0x8] sm:$0xff] %v416
                %v418 = vld [vmem:[%s412 + $0x20] sm:$0xff]
                %419 = vst [vmem:[%s413 + $0x10] sm:$0xff] %v418
                %v420 = vld [vmem:[%s412 + $0x30] sm:$0xff]
                %421 = vst [vmem:[%s413 + $0x18] sm:$0xff] %v420
                %v422 = vld [vmem:[%s412 + $0x40] sm:$0xff]
                %423 = vst [vmem:[%s413 + $0x20] sm:$0xff] %v422
                %v424 = vld [vmem:[%s412 + $0x50] sm:$0xff]
                %425 = vst [vmem:[%s413 + $0x28] sm:$0xff] %v424
                %v426 = vld [vmem:[%s412 + $0x60] sm:$0xff]
                %427 = vst [vmem:[%s413 + $0x30] sm:$0xff] %v426
                %v428 = vld [vmem:[%s412 + $0x70] sm:$0xff]
                %429 = vst [vmem:[%s413 + $0x38] sm:$0xff] %v428
              $region69: #{tpu_custom_call.1} parent=63 // loop_footer
                %s411 = sadd.s32 1, %s407
              $region70: #{tpu_custom_call.1} parent=63 // loop_footer_branch
                %406 = sbr.rel target = $region66
              $region71: #{tpu_custom_call.1} parent=63 // loop_exit
                _
            $region64: #{tpu_custom_call.1} parent=55 // pred_fallthru
              _
          $region56: #{tpu_custom_call.1} parent=51 // pred_fallthru
            _
          %458 = vnop
        $region52: #{tpu_custom_call.1} parent=47 // pred_fallthru
          _
        // Predicated region
        $region87: #{tpu_custom_call.1} parent=47 // pred_check
          %p459 = pneg %p87
        $region88: #{tpu_custom_call.1} parent=47 // pred_check_branch
          %461 = sbr.rel (%p459) target = $region90
        $region89: #{tpu_custom_call.1} parent=47 // pred_region
          %s462 = sand.u32 %s77, 1
          %s463 = scalar_lea.sflag [#allocation6], %s462
          %s464 = sand.u32 %s77, 1
          %s465 = smul.addr %s464, 64
          %s466 = scalar_lea.vmem [#allocation5], %s465
          %s468 = ssub.s32 1024, 1024
          %469 = vsyncadd %s463, %s468
          %s470 = smul.addr %s34, 8
          %s471 = smul.addr %s470, 128
          %s472 = scalar_lea.hbm %s1, %s471
          %s473 = sshll.u32 %s466, 4
          %s474 = int_to_ptr.vmem [resolvable:$true] %s473
          %479 = dma.hbm_to_vmem [thread:$0]  %s472, 1024, %s474, %s463, 128, 128, 8
        $region90: #{tpu_custom_call.1} parent=47 // pred_fallthru
          _
        // Predicated region
        $region91: #{tpu_custom_call.1} parent=47 // pred_check
          %p480 = pneg %p113
        $region92: #{tpu_custom_call.1} parent=47 // pred_check_branch
          %482 = sbr.rel (%p480) target = $region94
        $region93: #{tpu_custom_call.1} parent=47 // pred_region
          %s483 = sand.u32 %s27, 1
          %s484 = scalar_lea.sflag [#allocation9], %s483
          %s485 = sand.u32 %s103, 1
          %s486 = smul.addr %s485, 64
          %s487 = scalar_lea.vmem [#allocation8], %s486
          %s489 = ssub.s32 1024, 1024
          %490 = vsyncadd %s484, %s489
          %s491 = smul.addr %s34, 8
          %s492 = smul.addr %s491, 128
          %s493 = scalar_lea.hbm %s2, %s492
          %s494 = sshll.u32 %s487, 4
          %s495 = int_to_ptr.vmem [resolvable:$true] %s494
          %500 = dma.hbm_to_vmem [thread:$0]  %s493, 1024, %s495, %s484, 128, 128, 8
        $region94: #{tpu_custom_call.1} parent=47 // pred_fallthru
          _
      $region48: #{tpu_custom_call.1} parent=5 // pred_fallthru
        _
      %p501 = scmp.le.s32.totalorder 1, %s27
      %p502 = scmp.lt.s32.totalorder %s27, 5
      %p503 = pnand %p501, %p502
      %p504 = pneg %p503
      // Predicated region
      $region95: #{tpu_custom_call.1} parent=5 // pred_check
        _
      $region96: #{tpu_custom_call.1} parent=5 // pred_check_branch
        %506 = sbr.rel (%p503) target = $region98
      $region97: #{tpu_custom_call.1} parent=5 // pred_region
        %s507 = ssub.s32 %s27, 1
        %s508 = sand.u32 %s54, 1
        %s509 = sand.u32 %s54, 1
        %s510 = smul.addr %s509, 64
        %s511 = scalar_lea.vmem [#allocation4], %s510
        // Predicated region
        $region99: #{tpu_custom_call.1} parent=97 // pred_check
          %p512 = pneg %p67
        $region100: #{tpu_custom_call.1} parent=97 // pred_check_branch
          %514 = sbr.rel (%p512) target = $region102
        $region101: #{tpu_custom_call.1} parent=97 // pred_region
          _
        $region102: #{tpu_custom_call.1} parent=97 // pred_fallthru
          _
        %s515 = sand.u32 %s80, 1
        %s516 = scalar_lea.sflag [#allocation6], %s515
        %s517 = sand.u32 %s80, 1
        %s518 = smul.addr %s517, 64
        %s519 = scalar_lea.vmem [#allocation5], %s518
        // Predicated region
        $region103: #{tpu_custom_call.1} parent=97 // pred_check
          %p520 = pneg %p93
        $region104: #{tpu_custom_call.1} parent=97 // pred_check_branch
          %522 = sbr.rel (%p520) target = $region106
        $region105: #{tpu_custom_call.1} parent=97 // pred_region
          %523 = dma.done %s516, 1024
        $region106: #{tpu_custom_call.1} parent=97 // pred_fallthru
          _
        %s524 = sand.u32 %s32, 1
        %s525 = scalar_lea.sflag [#allocation9], %s524
        %s526 = sand.u32 %s106, 1
        %s527 = smul.addr %s526, 64
        %s528 = scalar_lea.vmem [#allocation8], %s527
        // Predicated region
        $region107: #{tpu_custom_call.1} parent=97 // pred_check
          %p529 = pneg %p119
        $region108: #{tpu_custom_call.1} parent=97 // pred_check_branch
          %531 = sbr.rel (%p529) target = $region110
        $region109: #{tpu_custom_call.1} parent=97 // pred_region
          %532 = dma.done %s525, 1024
        $region110: #{tpu_custom_call.1} parent=97 // pred_fallthru
          _
        // Predicated region
        $region111: #{tpu_custom_call.1} parent=97 // pred_check
          %p533 = pneg %p140
        $region112: #{tpu_custom_call.1} parent=97 // pred_check_branch
          %535 = sbr.rel (%p533) target = $region114
        $region113: #{tpu_custom_call.1} parent=97 // pred_region
          %536 = dma.done [#allocation9], 512
        $region114: #{tpu_custom_call.1} parent=97 // pred_fallthru
          _
        // Predicated region
        $region115: #{tpu_custom_call.1} parent=97 // pred_check
          %p537 = pneg %p182
        $region116: #{tpu_custom_call.1} parent=97 // pred_check_branch
          %539 = sbr.rel (%p537) target = $region118
        $region117: #{tpu_custom_call.1} parent=97 // pred_region
          %540 = dma.done [#allocation12], 512
        $region118: #{tpu_custom_call.1} parent=97 // pred_fallthru
          _
        // Predicated region
        $region119: #{tpu_custom_call.1} parent=97 // pred_check
          %p541 = pneg %p224
        $region120: #{tpu_custom_call.1} parent=97 // pred_check_branch
          %543 = sbr.rel (%p541) target = $region122
        $region121: #{tpu_custom_call.1} parent=97 // pred_region
          %544 = dma.done [#allocation12], 512
        $region122: #{tpu_custom_call.1} parent=97 // pred_fallthru
          _
        %s545 = sand.u32 %s54, 1
        %s546 = sand.u32 %s54, 1
        %s547 = smul.addr %s546, 64
        %s548 = scalar_lea.vmem [#allocation4], %s547
        %p549 = pneg %p67
        %p550 = pneg %p64
        %s551 = sand.u32 %s80, 1
        %s552 = scalar_lea.sflag [#allocation6], %s551
        %s553 = sand.u32 %s80, 1
        %s554 = smul.addr %s553, 64
        %s555 = scalar_lea.vmem [#allocation5], %s554
        %p556 = pneg %p93
        %p557 = pneg %p90
        %s558 = sand.u32 %s32, 1
        %s559 = scalar_lea.sflag [#allocation9], %s558
        %s560 = sand.u32 %s106, 1
        %s561 = smul.addr %s560, 64
        %s562 = scalar_lea.vmem [#allocation8], %s561
        %p563 = pneg %p119
        %p564 = pneg %p116
        %p565 = pneg %p140
        %p566 = pneg %p137
        %p567 = pneg %p161
        %p568 = pneg %p158
        %p569 = pneg %p182
        %p570 = pneg %p179
        %p571 = pneg %p203
        %p572 = pneg %p200
        %p573 = pneg %p224
        %p574 = pneg %p221
        %p575 = pneg %p245
        %p576 = pneg %p242
        %p577 = pneg %p266
        %p578 = pneg %p263
        %p579 = pneg %p287
        %p580 = pneg %p284
        %p581 = pneg %p315
        %p582 = pneg %p312
        %s583 = sand.u32 %s302, 1
        %s584 = scalar_lea.sflag [#allocation7], %s583
        %s585 = sand.u32 %s302, 1
        %s586 = smul.addr %s585, 64
        %s587 = scalar_lea.vmem [#allocation14], %s586
        %p589 = scmp.eq.s32.totalorder %s37, 0
        // Predicated region
        $region123: #{tpu_custom_call.1} parent=97 // pred_check
          %p590 = pneg %p589
        $region124: #{tpu_custom_call.1} parent=97 // pred_check_branch
          %592 = sbr.rel (%p590) target = $region126
        $region125: #{tpu_custom_call.1} parent=97 // pred_region
          %v593 = vld [vmem:[%s519] sm:$0xff]
          %v594 = vld [vmem:[%s519 + $0x8] sm:$0xff]
          %v595 = vld [vmem:[%s519 + $0x10] sm:$0xff]
          %v596 = vld [vmem:[%s519 + $0x18] sm:$0xff]
          %v597 = vld [vmem:[%s519 + $0x20] sm:$0xff]
          %v598 = vld [vmem:[%s519 + $0x28] sm:$0xff]
          %v599 = vld [vmem:[%s519 + $0x30] sm:$0xff]
          %v600 = vld [vmem:[%s519 + $0x38] sm:$0xff]
          %v601 = vpack.c.bf16 %v594, %v593
          %v602 = vpack.c.bf16 %v596, %v595
          %v603 = vpack.c.bf16 %v598, %v597
          %v604 = vpack.c.bf16 %v600, %v599
          %v605 = vld [vmem:[%s528] sm:$0xff]
          %v606 = vld [vmem:[%s528 + $0x8] sm:$0xff]
          %v607 = vld [vmem:[%s528 + $0x10] sm:$0xff]
          %v608 = vld [vmem:[%s528 + $0x18] sm:$0xff]
          %v609 = vld [vmem:[%s528 + $0x20] sm:$0xff]
          %v610 = vld [vmem:[%s528 + $0x28] sm:$0xff]
          %v611 = vld [vmem:[%s528 + $0x30] sm:$0xff]
          %v612 = vld [vmem:[%s528 + $0x38] sm:$0xff]
          %v613 = vpack.c.bf16 %v606, %v605
          %v614 = vpack.c.bf16 %v608, %v607
          %v615 = vpack.c.bf16 %v610, %v609
          %v616 = vpack.c.bf16 %v612, %v611
          %v617 = vld [vmem:[#allocation11] sm:$0xf]
          %v618 = vld [vmem:[#allocation11 + $0x4] sm:$0xf]
          %v619 = vld [vmem:[#allocation11 + $0x8] sm:$0xf]
          %v620 = vld [vmem:[#allocation11 + $0xc] sm:$0xf]
          %v621 = vld [vmem:[#allocation11 + $0x10] sm:$0xf]
          %v622 = vld [vmem:[#allocation11 + $0x14] sm:$0xf]
          %v623 = vld [vmem:[#allocation11 + $0x18] sm:$0xf]
          %v624 = vld [vmem:[#allocation11 + $0x1c] sm:$0xf]
          %v625 = vld [vmem:[%s6] sm:$0xff]
          %v626 = vld [vmem:[%s6 + $0x8] sm:$0xff]
          %v627 = vld [vmem:[%s6 + $0x10] sm:$0xff]
          %v628 = vld [vmem:[%s6 + $0x18] sm:$0xff]
          %v629 = vld [vmem:[%s6 + $0x20] sm:$0xff]
          %v630 = vld [vmem:[%s6 + $0x28] sm:$0xff]
          %v631 = vld [vmem:[%s6 + $0x30] sm:$0xff]
          %v632 = vld [vmem:[%s6 + $0x38] sm:$0xff]
          %634 = vset.pattern.permute.xlu0 0
          %635 = vperm.xlu0 %634, %v625
          %v636 = vpop.permute.xlu0 %635
          %639 = vset.pattern.permute.xlu0 0
          %640 = vperm.xlu0 %639, %v626
          %v641 = vpop.permute.xlu0 %640
          %644 = vset.pattern.permute.xlu0 0
          %645 = vperm.xlu0 %644, %v627
          %v646 = vpop.permute.xlu0 %645
          %649 = vset.pattern.permute.xlu0 0
          %650 = vperm.xlu0 %649, %v628
          %v651 = vpop.permute.xlu0 %650
          %654 = vset.pattern.permute.xlu0 0
          %655 = vperm.xlu0 %654, %v629
          %v656 = vpop.permute.xlu0 %655
          %659 = vset.pattern.permute.xlu0 0
          %660 = vperm.xlu0 %659, %v630
          %v661 = vpop.permute.xlu0 %660
          %664 = vset.pattern.permute.xlu0 0
          %665 = vperm.xlu0 %664, %v631
          %v666 = vpop.permute.xlu0 %665
          %669 = vset.pattern.permute.xlu0 0
          %670 = vperm.xlu0 %669, %v632
          %v671 = vpop.permute.xlu0 %670
          %v681 = vunpack.c.l.b16 %v617
          %v682 = vunpack.c.l.b16 %v618
          %v683 = vunpack.c.l.b16 %v619
          %v684 = vunpack.c.l.b16 %v620
          %v685 = vunpack.c.l.b16 %v621
          %v686 = vunpack.c.l.b16 %v622
          %v687 = vunpack.c.l.b16 %v623
          %v688 = vunpack.c.l.b16 %v624
          %v689 = vpack.c.b16 %v682, %v681
          %v690 = vpack.c.b16 %v684, %v683
          %v691 = vpack.c.b16 %v686, %v685
          %v692 = vpack.c.b16 %v688, %v687
          %vm693 = vcmask 523264
          %v695 = vsel %vm693, %v689, 0
          %v698 = vsel %vm693, %v690, 0
          %v701 = vsel %vm693, %v691, 0
          %v704 = vsel %vm693, %v692, 0
          %706 = vmatprep.subr.bf16.mxu0 0
          %707 = vmatpush1.bf16.msra.mxu0 %v601
          %708 = vmatprep.subr.bf16.mxu0 0
          %709 = vmatpush1.bf16.msra.mxu0 %v602
          %710 = vmatprep.subr.bf16.mxu0 0
          %711 = vmatpush1.bf16.msra.mxu0 %v603
          %712 = vmatprep.subr.bf16.mxu0 0
          %713 = vmatpush1.bf16.msra.mxu0 %v604
          %714 = vmatprep.subr.bf16.mxu0 0
          %715 = vmatpush1.bf16.msra.mxu0 0
          %716 = vmatprep.subr.bf16.mxu0 0
          %717 = vmatpush1.bf16.msra.mxu0 0
          %718 = vmatprep.subr.bf16.mxu0 0
          %719 = vmatpush1.bf16.msra.mxu0 0
          %720 = vmatprep.subr.bf16.mxu0 0
          %721 = vmatpush1.bf16.msra.mxu0 0
          %722 = vmatprep.subr.bf16.mxu0 0
          %723 = vmatpush1.bf16.msra.mxu0 0
          %724 = vmatprep.subr.bf16.mxu0 0
          %725 = vmatpush1.bf16.msra.mxu0 0
          %726 = vmatprep.subr.bf16.mxu0 0
          %727 = vmatpush1.bf16.msra.mxu0 0
          %728 = vmatprep.subr.bf16.mxu0 0
          %729 = vmatpush1.bf16.msra.mxu0 0
          %730 = vmatprep.subr.bf16.mxu0 0
          %731 = vmatpush1.bf16.msra.mxu0 0
          %732 = vmatprep.subr.bf16.mxu0 0
          %733 = vmatpush1.bf16.msra.mxu0 0
          %734 = vmatprep.subr.bf16.mxu0 0
          %735 = vmatpush1.bf16.msra.mxu0 0
          %736 = vmatprep.subr.bf16.mxu0 0
          %737 = vmatpush1.bf16.msra.mxu0 0
          %738 = vmatprep.mubr.bf16.mxu0 0
          %739 = vmatmul.mubr.bf16.gmra.mrb[0].mxu0 %v695
          %v740 = vpop.f32.mrb[0].mxu0
          %v741 = vadd.f32 %v636, %v740
          %v742 = vpop.f32.mrb[0].mxu0
          %v743 = vpop.f32.mrb[0].mxu0
          %v744 = vadd.f32 %v641, %v743
          %v745 = vpop.f32.mrb[0].mxu0
          %746 = vmatprep.mubr.bf16.mxu0 0
          %747 = vmatmul.mubr.bf16.gmra.mrb[0].mxu0 %v698
          %v748 = vpop.f32.mrb[0].mxu0
          %v749 = vadd.f32 %v646, %v748
          %v750 = vpop.f32.mrb[0].mxu0
          %v751 = vpop.f32.mrb[0].mxu0
          %v752 = vadd.f32 %v651, %v751
          %v753 = vpop.f32.mrb[0].mxu0
          %754 = vmatprep.mubr.bf16.mxu0 0
          %755 = vmatmul.mubr.bf16.gmra.mrb[0].mxu0 %v701
          %v756 = vpop.f32.mrb[0].mxu0
          %v757 = vadd.f32 %v656, %v756
          %v758 = vpop.f32.mrb[0].mxu0
          %v759 = vpop.f32.mrb[0].mxu0
          %v760 = vadd.f32 %v661, %v759
          %v761 = vpop.f32.mrb[0].mxu0
          %762 = vmatprep.mubr.bf16.mxu0 0
          %763 = vmatmul.mubr.bf16.gmra.mrb[0].mxu0 %v704
          %v764 = vpop.f32.mrb[0].mxu0
          %v765 = vadd.f32 %v666, %v764
          %v766 = vpop.f32.mrb[0].mxu0
          %v767 = vpop.f32.mrb[0].mxu0
          %v768 = vadd.f32 %v671, %v767
          %v769 = vpop.f32.mrb[0].mxu0
          %770 = vdwg.mxu0
          %v771 = vld [vmem:[#allocation13] sm:$0xf]
          %v772 = vld [vmem:[#allocation13 + $0x4] sm:$0xf]
          %v773 = vld [vmem:[#allocation13 + $0x8] sm:$0xf]
          %v774 = vld [vmem:[#allocation13 + $0xc] sm:$0xf]
          %v775 = vld [vmem:[#allocation13 + $0x10] sm:$0xf]
          %v776 = vld [vmem:[#allocation13 + $0x14] sm:$0xf]
          %v777 = vld [vmem:[#allocation13 + $0x18] sm:$0xf]
          %v778 = vld [vmem:[#allocation13 + $0x1c] sm:$0xf]
          %v779 = vld [vmem:[%s8] sm:$0xff]
          %v780 = vld [vmem:[%s8 + $0x8] sm:$0xff]
          %v781 = vld [vmem:[%s8 + $0x10] sm:$0xff]
          %v782 = vld [vmem:[%s8 + $0x18] sm:$0xff]
          %v783 = vld [vmem:[%s8 + $0x20] sm:$0xff]
          %v784 = vld [vmem:[%s8 + $0x28] sm:$0xff]
          %v785 = vld [vmem:[%s8 + $0x30] sm:$0xff]
          %v786 = vld [vmem:[%s8 + $0x38] sm:$0xff]
          %788 = vset.pattern.permute.xlu0 0
          %789 = vperm.xlu0 %788, %v779
          %v790 = vpop.permute.xlu0 %789
          %793 = vset.pattern.permute.xlu0 0
          %794 = vperm.xlu0 %793, %v780
          %v795 = vpop.permute.xlu0 %794
          %798 = vset.pattern.permute.xlu0 0
          %799 = vperm.xlu0 %798, %v781
          %v800 = vpop.permute.xlu0 %799
          %803 = vset.pattern.permute.xlu0 0
          %804 = vperm.xlu0 %803, %v782
          %v805 = vpop.permute.xlu0 %804
          %808 = vset.pattern.permute.xlu0 0
          %809 = vperm.xlu0 %808, %v783
          %v810 = vpop.permute.xlu0 %809
          %813 = vset.pattern.permute.xlu0 0
          %814 = vperm.xlu0 %813, %v784
          %v815 = vpop.permute.xlu0 %814
          %818 = vset.pattern.permute.xlu0 0
          %819 = vperm.xlu0 %818, %v785
          %v820 = vpop.permute.xlu0 %819
          %823 = vset.pattern.permute.xlu0 0
          %824 = vperm.xlu0 %823, %v786
          %v825 = vpop.permute.xlu0 %824
          %v835 = vunpack.c.l.b16 %v771
          %v836 = vunpack.c.l.b16 %v772
          %v837 = vunpack.c.l.b16 %v773
          %v838 = vunpack.c.l.b16 %v774
          %v839 = vunpack.c.l.b16 %v775
          %v840 = vunpack.c.l.b16 %v776
          %v841 = vunpack.c.l.b16 %v777
          %v842 = vunpack.c.l.b16 %v778
          %v843 = vpack.c.b16 %v836, %v835
          %v844 = vpack.c.b16 %v838, %v837
          %v845 = vpack.c.b16 %v840, %v839
          %v846 = vpack.c.b16 %v842, %v841
          %v848 = vsel %vm693, %v843, 0
          %v851 = vsel %vm693, %v844, 0
          %v854 = vsel %vm693, %v845, 0
          %v857 = vsel %vm693, %v846, 0
          %859 = vmatprep.subr.bf16.mxu0 0
          %860 = vmatpush1.bf16.msra.mxu0 %v613
          %861 = vmatprep.subr.bf16.mxu0 0
          %862 = vmatpush1.bf16.msra.mxu0 %v614
          %863 = vmatprep.subr.bf16.mxu0 0
          %864 = vmatpush1.bf16.msra.mxu0 %v615
          %865 = vmatprep.subr.bf16.mxu0 0
          %866 = vmatpush1.bf16.msra.mxu0 %v616
          %867 = vmatprep.subr.bf16.mxu0 0
          %868 = vmatpush1.bf16.msra.mxu0 0
          %869 = vmatprep.subr.bf16.mxu0 0
          %870 = vmatpush1.bf16.msra.mxu0 0
          %871 = vmatprep.subr.bf16.mxu0 0
          %872 = vmatpush1.bf16.msra.mxu0 0
          %873 = vmatprep.subr.bf16.mxu0 0
          %874 = vmatpush1.bf16.msra.mxu0 0
          %875 = vmatprep.subr.bf16.mxu0 0
          %876 = vmatpush1.bf16.msra.mxu0 0
          %877 = vmatprep.subr.bf16.mxu0 0
          %878 = vmatpush1.bf16.msra.mxu0 0
          %879 = vmatprep.subr.bf16.mxu0 0
          %880 = vmatpush1.bf16.msra.mxu0 0
          %881 = vmatprep.subr.bf16.mxu0 0
          %882 = vmatpush1.bf16.msra.mxu0 0
          %883 = vmatprep.subr.bf16.mxu0 0
          %884 = vmatpush1.bf16.msra.mxu0 0
          %885 = vmatprep.subr.bf16.mxu0 0
          %886 = vmatpush1.bf16.msra.mxu0 0
          %887 = vmatprep.subr.bf16.mxu0 0
          %888 = vmatpush1.bf16.msra.mxu0 0
          %889 = vmatprep.subr.bf16.mxu0 0
          %890 = vmatpush1.bf16.msra.mxu0 0
          %891 = vmatprep.mubr.bf16.mxu0 0
          %892 = vmatmul.mubr.bf16.gmra.mrb[0].mxu0 %v848
          %v893 = vpop.f32.mrb[0].mxu0
          %v894 = vadd.f32 %v790, %v893
          %v895 = vpop.f32.mrb[0].mxu0
          %v896 = vpop.f32.mrb[0].mxu0
          %v897 = vadd.f32 %v795, %v896
          %v898 = vpop.f32.mrb[0].mxu0
          %899 = vmatprep.mubr.bf16.mxu0 0
          %900 = vmatmul.mubr.bf16.gmra.mrb[0].mxu0 %v851
          %v901 = vpop.f32.mrb[0].mxu0
          %v902 = vadd.f32 %v800, %v901
          %v903 = vpop.f32.mrb[0].mxu0
          %v904 = vpop.f32.mrb[0].mxu0
          %v905 = vadd.f32 %v805, %v904
          %v906 = vpop.f32.mrb[0].mxu0
          %907 = vmatprep.mubr.bf16.mxu0 0
          %908 = vmatmul.mubr.bf16.gmra.mrb[0].mxu0 %v854
          %v909 = vpop.f32.mrb[0].mxu0
          %v910 = vadd.f32 %v810, %v909
          %v911 = vpop.f32.mrb[0].mxu0
          %v912 = vpop.f32.mrb[0].mxu0
          %v913 = vadd.f32 %v815, %v912
          %v914 = vpop.f32.mrb[0].mxu0
          %915 = vmatprep.mubr.bf16.mxu0 0
          %916 = vmatmul.mubr.bf16.gmra.mrb[0].mxu0 %v857
          %v917 = vpop.f32.mrb[0].mxu0
          %v918 = vadd.f32 %v820, %v917
          %v919 = vpop.f32.mrb[0].mxu0
          %v920 = vpop.f32.mrb[0].mxu0
          %v921 = vadd.f32 %v825, %v920
          %v922 = vpop.f32.mrb[0].mxu0
          %923 = vdwg.mxu0
          %v924 = vpack.c.bf16 %v744, %v741
          %v925 = vpack.c.bf16 %v752, %v749
          %v926 = vpack.c.bf16 %v760, %v757
          %v927 = vpack.c.bf16 %v768, %v765
          %928 = vst [vmem:[#allocation2] sm:$0xff] %v924
          %929 = vst [vmem:[#allocation2 + $0x8] sm:$0xff] %v925
          %930 = vst [vmem:[#allocation2 + $0x10] sm:$0xff] %v926
          %931 = vst [vmem:[#allocation2 + $0x18] sm:$0xff] %v927
          %v932 = vpack.c.bf16 %v897, %v894
          %v933 = vpack.c.bf16 %v905, %v902
          %v934 = vpack.c.bf16 %v913, %v910
          %v935 = vpack.c.bf16 %v921, %v918
          %936 = vst [vmem:[#allocation3] sm:$0xff] %v932
          %937 = vst [vmem:[#allocation3 + $0x8] sm:$0xff] %v933
          %938 = vst [vmem:[#allocation3 + $0x10] sm:$0xff] %v934
          %939 = vst [vmem:[#allocation3 + $0x18] sm:$0xff] %v935
        $region126: #{tpu_custom_call.1} parent=97 // pred_fallthru
          _
        %v940 = vld [vmem:[%s511] sm:$0xff]
        %v941 = vld [vmem:[%s511 + $0x8] sm:$0xff]
        %v942 = vld [vmem:[%s511 + $0x10] sm:$0xff]
        %v943 = vld [vmem:[%s511 + $0x18] sm:$0xff]
        %v944 = vld [vmem:[%s511 + $0x20] sm:$0xff]
        %v945 = vld [vmem:[%s511 + $0x28] sm:$0xff]
        %v946 = vld [vmem:[%s511 + $0x30] sm:$0xff]
        %v947 = vld [vmem:[%s511 + $0x38] sm:$0xff]
        %v948 = vpack.c.bf16 %v941, %v940
        %v949 = vpack.c.bf16 %v943, %v942
        %v950 = vpack.c.bf16 %v945, %v944
        %v951 = vpack.c.bf16 %v947, %v946
        %v952 = vld [vmem:[#allocation10] sm:$0xf]
        %v953 = vld [vmem:[#allocation10 + $0x4] sm:$0xf]
        %v954 = vld [vmem:[#allocation10 + $0x8] sm:$0xf]
        %v955 = vld [vmem:[#allocation10 + $0xc] sm:$0xf]
        %v956 = vld [vmem:[#allocation10 + $0x10] sm:$0xf]
        %v957 = vld [vmem:[#allocation10 + $0x14] sm:$0xf]
        %v958 = vld [vmem:[#allocation10 + $0x18] sm:$0xf]
        %v959 = vld [vmem:[#allocation10 + $0x1c] sm:$0xf]
        %v960 = vld [vmem:[%s4] sm:$0xff]
        %v961 = vld [vmem:[%s4 + $0x8] sm:$0xff]
        %v962 = vld [vmem:[%s4 + $0x10] sm:$0xff]
        %v963 = vld [vmem:[%s4 + $0x18] sm:$0xff]
        %v964 = vld [vmem:[%s4 + $0x20] sm:$0xff]
        %v965 = vld [vmem:[%s4 + $0x28] sm:$0xff]
        %v966 = vld [vmem:[%s4 + $0x30] sm:$0xff]
        %v967 = vld [vmem:[%s4 + $0x38] sm:$0xff]
        %969 = vset.pattern.permute.xlu0 0
        %970 = vperm.xlu0 %969, %v960
        %v971 = vpop.permute.xlu0 %970
        %974 = vset.pattern.permute.xlu0 0
        %975 = vperm.xlu0 %974, %v961
        %v976 = vpop.permute.xlu0 %975
        %979 = vset.pattern.permute.xlu0 0
        %980 = vperm.xlu0 %979, %v962
        %v981 = vpop.permute.xlu0 %980
        %984 = vset.pattern.permute.xlu0 0
        %985 = vperm.xlu0 %984, %v963
        %v986 = vpop.permute.xlu0 %985
        %989 = vset.pattern.permute.xlu0 0
        %990 = vperm.xlu0 %989, %v964
        %v991 = vpop.permute.xlu0 %990
        %994 = vset.pattern.permute.xlu0 0
        %995 = vperm.xlu0 %994, %v965
        %v996 = vpop.permute.xlu0 %995
        %999 = vset.pattern.permute.xlu0 0
        %1000 = vperm.xlu0 %999, %v966
        %v1001 = vpop.permute.xlu0 %1000
        %1004 = vset.pattern.permute.xlu0 0
        %1005 = vperm.xlu0 %1004, %v967
        %v1006 = vpop.permute.xlu0 %1005
        %v1016 = vunpack.c.l.b16 %v952
        %v1017 = vunpack.c.l.b16 %v953
        %v1018 = vunpack.c.l.b16 %v954
        %v1019 = vunpack.c.l.b16 %v955
        %v1020 = vunpack.c.l.b16 %v956
        %v1021 = vunpack.c.l.b16 %v957
        %v1022 = vunpack.c.l.b16 %v958
        %v1023 = vunpack.c.l.b16 %v959
        %v1024 = vpack.c.b16 %v1017, %v1016
        %v1025 = vpack.c.b16 %v1019, %v1018
        %v1026 = vpack.c.b16 %v1021, %v1020
        %v1027 = vpack.c.b16 %v1023, %v1022
        %vm1028 = vcmask 523264
        %v1030 = vsel %vm1028, %v1024, 0
        %v1033 = vsel %vm1028, %v1025, 0
        %v1036 = vsel %vm1028, %v1026, 0
        %v1039 = vsel %vm1028, %v1027, 0
        %1041 = vmatprep.subr.bf16.mxu0 0
        %1042 = vmatpush1.bf16.msra.mxu0 %v948
        %1043 = vmatprep.subr.bf16.mxu0 0
        %1044 = vmatpush1.bf16.msra.mxu0 %v949
        %1045 = vmatprep.subr.bf16.mxu0 0
        %1046 = vmatpush1.bf16.msra.mxu0 %v950
        %1047 = vmatprep.subr.bf16.mxu0 0
        %1048 = vmatpush1.bf16.msra.mxu0 %v951
        %1049 = vmatprep.subr.bf16.mxu0 0
        %1050 = vmatpush1.bf16.msra.mxu0 0
        %1051 = vmatprep.subr.bf16.mxu0 0
        %1052 = vmatpush1.bf16.msra.mxu0 0
        %1053 = vmatprep.subr.bf16.mxu0 0
        %1054 = vmatpush1.bf16.msra.mxu0 0
        %1055 = vmatprep.subr.bf16.mxu0 0
        %1056 = vmatpush1.bf16.msra.mxu0 0
        %1057 = vmatprep.subr.bf16.mxu0 0
        %1058 = vmatpush1.bf16.msra.mxu0 0
        %1059 = vmatprep.subr.bf16.mxu0 0
        %1060 = vmatpush1.bf16.msra.mxu0 0
        %1061 = vmatprep.subr.bf16.mxu0 0
        %1062 = vmatpush1.bf16.msra.mxu0 0
        %1063 = vmatprep.subr.bf16.mxu0 0
        %1064 = vmatpush1.bf16.msra.mxu0 0
        %1065 = vmatprep.subr.bf16.mxu0 0
        %1066 = vmatpush1.bf16.msra.mxu0 0
        %1067 = vmatprep.subr.bf16.mxu0 0
        %1068 = vmatpush1.bf16.msra.mxu0 0
        %1069 = vmatprep.subr.bf16.mxu0 0
        %1070 = vmatpush1.bf16.msra.mxu0 0
        %1071 = vmatprep.subr.bf16.mxu0 0
        %1072 = vmatpush1.bf16.msra.mxu0 0
        %1073 = vmatprep.mubr.bf16.mxu0 0
        %1074 = vmatmul.mubr.bf16.gmra.mrb[0].mxu0 %v1030
        %v1075 = vpop.f32.mrb[0].mxu0
        %v1076 = vadd.f32 %v971, %v1075
        %v1077 = vpop.f32.mrb[0].mxu0
        %v1078 = vpop.f32.mrb[0].mxu0
        %v1079 = vadd.f32 %v976, %v1078
        %v1080 = vpop.f32.mrb[0].mxu0
        %1081 = vmatprep.mubr.bf16.mxu0 0
        %1082 = vmatmul.mubr.bf16.gmra.mrb[0].mxu0 %v1033
        %v1083 = vpop.f32.mrb[0].mxu0
        %v1084 = vadd.f32 %v981, %v1083
        %v1085 = vpop.f32.mrb[0].mxu0
        %v1086 = vpop.f32.mrb[0].mxu0
        %v1087 = vadd.f32 %v986, %v1086
        %v1088 = vpop.f32.mrb[0].mxu0
        %1089 = vmatprep.mubr.bf16.mxu0 0
        %1090 = vmatmul.mubr.bf16.gmra.mrb[0].mxu0 %v1036
        %v1091 = vpop.f32.mrb[0].mxu0
        %v1092 = vadd.f32 %v991, %v1091
        %v1093 = vpop.f32.mrb[0].mxu0
        %v1094 = vpop.f32.mrb[0].mxu0
        %v1095 = vadd.f32 %v996, %v1094
        %v1096 = vpop.f32.mrb[0].mxu0
        %1097 = vmatprep.mubr.bf16.mxu0 0
        %1098 = vmatmul.mubr.bf16.gmra.mrb[0].mxu0 %v1039
        %v1099 = vpop.f32.mrb[0].mxu0
        %v1100 = vadd.f32 %v1001, %v1099
        %v1101 = vpop.f32.mrb[0].mxu0
        %v1102 = vpop.f32.mrb[0].mxu0
        %v1103 = vadd.f32 %v1006, %v1102
        %v1104 = vpop.f32.mrb[0].mxu0
        %1105 = vdwg.mxu0
        %v1106 = vpack.c.bf16 %v1079, %v1076
        %v1107 = vpack.c.bf16 %v1087, %v1084
        %v1108 = vpack.c.bf16 %v1095, %v1092
        %v1109 = vpack.c.bf16 %v1103, %v1100
        %v1110 = vld [vmem:[#allocation2] sm:$0xff]
        %v1111 = vld [vmem:[#allocation2 + $0x8] sm:$0xff]
        %v1112 = vld [vmem:[#allocation2 + $0x10] sm:$0xff]
        %v1113 = vld [vmem:[#allocation2 + $0x18] sm:$0xff]
        %v1114 = vld [vmem:[#allocation3] sm:$0xff]
        %v1115 = vld [vmem:[#allocation3 + $0x8] sm:$0xff]
        %v1116 = vld [vmem:[#allocation3 + $0x10] sm:$0xff]
        %v1117 = vld [vmem:[#allocation3 + $0x18] sm:$0xff]
        %1118 = vxpose.xlu0.c.b16.start [1/8] %v1110, 128
        %1119 = vxpose.xlu0.c.b16.cont [2/8] 0, 128
        %1120 = vxpose.xlu0.c.b16.cont [3/8] 0, 128
        %1121 = vxpose.xlu0.c.b16.cont [4/8] 0, 128
        %1122 = vxpose.xlu0.c.b16.cont [5/8] 0, 128
        %1123 = vxpose.xlu0.c.b16.cont [6/8] 0, 128
        %1124 = vxpose.xlu0.c.b16.cont [7/8] 0, 128
        %1125 = vxpose.xlu0.c.b16.end [8/8] 0, 128
        %v1126 = vpop.trf.xlu0
        %v1127 = vpop.trf.xlu0
        %v1128 = vpop.trf.xlu0
        %v1129 = vpop.trf.xlu0
        %v1130 = vpop.trf.xlu0
        %v1131 = vpop.trf.xlu0
        %v1132 = vpop.trf.xlu0
        %v1133 = vpop.trf.xlu0
        %vm1134 = vcmask 130048
        %v1136 = vsel %vm1134, %v1126, 0
        %v1139 = vsel %vm1134, %v1127, 0
        %v1142 = vsel %vm1134, %v1128, 0
        %v1145 = vsel %vm1134, %v1129, 0
        %v1148 = vsel %vm1134, %v1130, 0
        %v1151 = vsel %vm1134, %v1131, 0
        %v1154 = vsel %vm1134, %v1132, 0
        %v1157 = vsel %vm1134, %v1133, 0
        %1159 = vmatprep.subr.bf16.mxu0 0
        %1160 = vmatpush1.bf16.msra.mxu0 %v1106
        %1161 = vmatprep.subr.bf16.mxu0 0
        %1162 = vmatpush1.bf16.msra.mxu0 0
        %1163 = vmatprep.subr.bf16.mxu0 0
        %1164 = vmatpush1.bf16.msra.mxu0 0
        %1165 = vmatprep.subr.bf16.mxu0 0
        %1166 = vmatpush1.bf16.msra.mxu0 0
        %1167 = vmatprep.subr.bf16.mxu0 0
        %1168 = vmatpush1.bf16.msra.mxu0 0
        %1169 = vmatprep.subr.bf16.mxu0 0
        %1170 = vmatpush1.bf16.msra.mxu0 0
        %1171 = vmatprep.subr.bf16.mxu0 0
        %1172 = vmatpush1.bf16.msra.mxu0 0
        %1173 = vmatprep.subr.bf16.mxu0 0
        %1174 = vmatpush1.bf16.msra.mxu0 0
        %1175 = vmatprep.subr.bf16.mxu0 0
        %1176 = vmatpush1.bf16.msra.mxu0 0
        %1177 = vmatprep.subr.bf16.mxu0 0
        %1178 = vmatpush1.bf16.msra.mxu0 0
        %1179 = vmatprep.subr.bf16.mxu0 0
        %1180 = vmatpush1.bf16.msra.mxu0 0
        %1181 = vmatprep.subr.bf16.mxu0 0
        %1182 = vmatpush1.bf16.msra.mxu0 0
        %1183 = vmatprep.subr.bf16.mxu0 0
        %1184 = vmatpush1.bf16.msra.mxu0 0
        %1185 = vmatprep.subr.bf16.mxu0 0
        %1186 = vmatpush1.bf16.msra.mxu0 0
        %1187 = vmatprep.subr.bf16.mxu0 0
        %1188 = vmatpush1.bf16.msra.mxu0 0
        %1189 = vmatprep.subr.bf16.mxu0 0
        %1190 = vmatpush1.bf16.msra.mxu0 0
        %1191 = vmatprep.mubr.bf16.mxu0 0
        %1192 = vmatmul.mubr.bf16.gmra.mrb[0].mxu0 %v1136
        %v1193 = vpop.f32.mrb[0].mxu0
        %v1194 = vadd.f32 0.0, %v1193
        %v1195 = vpop.f32.mrb[0].mxu0
        %v1196 = vpop.f32.mrb[0].mxu0
        %v1197 = vadd.f32 0.0, %v1196
        %v1198 = vpop.f32.mrb[0].mxu0
        %1199 = vmatprep.mubr.bf16.mxu0 0
        %1200 = vmatmul.mubr.bf16.gmra.mrb[0].mxu0 %v1139
        %v1201 = vpop.f32.mrb[0].mxu0
        %v1202 = vadd.f32 0.0, %v1201
        %v1203 = vpop.f32.mrb[0].mxu0
        %v1204 = vpop.f32.mrb[0].mxu0
        %v1205 = vadd.f32 0.0, %v1204
        %v1206 = vpop.f32.mrb[0].mxu0
        %1207 = vmatprep.mubr.bf16.mxu0 0
        %1208 = vmatmul.mubr.bf16.gmra.mrb[0].mxu0 %v1142
        %v1209 = vpop.f32.mrb[0].mxu0
        %v1210 = vadd.f32 0.0, %v1209
        %v1211 = vpop.f32.mrb[0].mxu0
        %v1212 = vpop.f32.mrb[0].mxu0
        %v1213 = vadd.f32 0.0, %v1212
        %v1214 = vpop.f32.mrb[0].mxu0
        %1215 = vmatprep.mubr.bf16.mxu0 0
        %1216 = vmatmul.mubr.bf16.gmra.mrb[0].mxu0 %v1145
        %v1217 = vpop.f32.mrb[0].mxu0
        %v1218 = vadd.f32 0.0, %v1217
        %v1219 = vpop.f32.mrb[0].mxu0
        %v1220 = vpop.f32.mrb[0].mxu0
        %v1221 = vadd.f32 0.0, %v1220
        %v1222 = vpop.f32.mrb[0].mxu0
        %1223 = vmatprep.mubr.bf16.mxu0 0
        %1224 = vmatmul.mubr.bf16.gmra.mrb[0].mxu0 %v1148
        %v1225 = vpop.f32.mrb[0].mxu0
        %v1226 = vadd.f32 0.0, %v1225
        %v1227 = vpop.f32.mrb[0].mxu0
        %v1228 = vpop.f32.mrb[0].mxu0
        %v1229 = vadd.f32 0.0, %v1228
        %v1230 = vpop.f32.mrb[0].mxu0
        %1231 = vmatprep.mubr.bf16.mxu0 0
        %1232 = vmatmul.mubr.bf16.gmra.mrb[0].mxu0 %v1151
        %v1233 = vpop.f32.mrb[0].mxu0
        %v1234 = vadd.f32 0.0, %v1233
        %v1235 = vpop.f32.mrb[0].mxu0
        %v1236 = vpop.f32.mrb[0].mxu0
        %v1237 = vadd.f32 0.0, %v1236
        %v1238 = vpop.f32.mrb[0].mxu0
        %1239 = vmatprep.mubr.bf16.mxu0 0
        %1240 = vmatmul.mubr.bf16.gmra.mrb[0].mxu0 %v1154
        %v1241 = vpop.f32.mrb[0].mxu0
        %v1242 = vadd.f32 0.0, %v1241
        %v1243 = vpop.f32.mrb[0].mxu0
        %v1244 = vpop.f32.mrb[0].mxu0
        %v1245 = vadd.f32 0.0, %v1244
        %v1246 = vpop.f32.mrb[0].mxu0
        %1247 = vmatprep.mubr.bf16.mxu0 0
        %1248 = vmatmul.mubr.bf16.gmra.mrb[0].mxu0 %v1157
        %v1249 = vpop.f32.mrb[0].mxu0
        %v1250 = vadd.f32 0.0, %v1249
        %v1251 = vpop.f32.mrb[0].mxu0
        %v1252 = vpop.f32.mrb[0].mxu0
        %v1253 = vadd.f32 0.0, %v1252
        %v1254 = vpop.f32.mrb[0].mxu0
        %1255 = vdwg.mxu0
        %1256 = vxpose.xlu0.c.b16.start [1/8] %v1111, 128
        %1257 = vxpose.xlu0.c.b16.cont [2/8] 0, 128
        %1258 = vxpose.xlu0.c.b16.cont [3/8] 0, 128
        %1259 = vxpose.xlu0.c.b16.cont [4/8] 0, 128
        %1260 = vxpose.xlu0.c.b16.cont [5/8] 0, 128
        %1261 = vxpose.xlu0.c.b16.cont [6/8] 0, 128
        %1262 = vxpose.xlu0.c.b16.cont [7/8] 0, 128
        %1263 = vxpose.xlu0.c.b16.end [8/8] 0, 128
        %v1264 = vpop.trf.xlu0
        %v1265 = vpop.trf.xlu0
        %v1266 = vpop.trf.xlu0
        %v1267 = vpop.trf.xlu0
        %v1268 = vpop.trf.xlu0
        %v1269 = vpop.trf.xlu0
        %v1270 = vpop.trf.xlu0
        %v1271 = vpop.trf.xlu0
        %v1273 = vsel %vm1134, %v1264, 0
        %v1276 = vsel %vm1134, %v1265, 0
        %v1279 = vsel %vm1134, %v1266, 0
        %v1282 = vsel %vm1134, %v1267, 0
        %v1285 = vsel %vm1134, %v1268, 0
        %v1288 = vsel %vm1134, %v1269, 0
        %v1291 = vsel %vm1134, %v1270, 0
        %v1294 = vsel %vm1134, %v1271, 0
        %1296 = vmatprep.subr.bf16.mxu0 0
        %1297 = vmatpush1.bf16.msra.mxu0 %v1107
        %1298 = vmatprep.subr.bf16.mxu0 0
        %1299 = vmatpush1.bf16.msra.mxu0 0
        %1300 = vmatprep.subr.bf16.mxu0 0
        %1301 = vmatpush1.bf16.msra.mxu0 0
        %1302 = vmatprep.subr.bf16.mxu0 0
        %1303 = vmatpush1.bf16.msra.mxu0 0
        %1304 = vmatprep.subr.bf16.mxu0 0
        %1305 = vmatpush1.bf16.msra.mxu0 0
        %1306 = vmatprep.subr.bf16.mxu0 0
        %1307 = vmatpush1.bf16.msra.mxu0 0
        %1308 = vmatprep.subr.bf16.mxu0 0
        %1309 = vmatpush1.bf16.msra.mxu0 0
        %1310 = vmatprep.subr.bf16.mxu0 0
        %1311 = vmatpush1.bf16.msra.mxu0 0
        %1312 = vmatprep.subr.bf16.mxu0 0
        %1313 = vmatpush1.bf16.msra.mxu0 0
        %1314 = vmatprep.subr.bf16.mxu0 0
        %1315 = vmatpush1.bf16.msra.mxu0 0
        %1316 = vmatprep.subr.bf16.mxu0 0
        %1317 = vmatpush1.bf16.msra.mxu0 0
        %1318 = vmatprep.subr.bf16.mxu0 0
        %1319 = vmatpush1.bf16.msra.mxu0 0
        %1320 = vmatprep.subr.bf16.mxu0 0
        %1321 = vmatpush1.bf16.msra.mxu0 0
        %1322 = vmatprep.subr.bf16.mxu0 0
        %1323 = vmatpush1.bf16.msra.mxu0 0
        %1324 = vmatprep.subr.bf16.mxu0 0
        %1325 = vmatpush1.bf16.msra.mxu0 0
        %1326 = vmatprep.subr.bf16.mxu0 0
        %1327 = vmatpush1.bf16.msra.mxu0 0
        %1328 = vmatprep.mubr.bf16.mxu0 0
        %1329 = vmatmul.mubr.bf16.gmra.mrb[0].mxu0 %v1273
        %v1330 = vpop.f32.mrb[0].mxu0
        %v1331 = vadd.f32 0.0, %v1330
        %v1332 = vpop.f32.mrb[0].mxu0
        %v1333 = vpop.f32.mrb[0].mxu0
        %v1334 = vadd.f32 0.0, %v1333
        %v1335 = vpop.f32.mrb[0].mxu0
        %1336 = vmatprep.mubr.bf16.mxu0 0
        %1337 = vmatmul.mubr.bf16.gmra.mrb[0].mxu0 %v1276
        %v1338 = vpop.f32.mrb[0].mxu0
        %v1339 = vadd.f32 0.0, %v1338
        %v1340 = vpop.f32.mrb[0].mxu0
        %v1341 = vpop.f32.mrb[0].mxu0
        %v1342 = vadd.f32 0.0, %v1341
        %v1343 = vpop.f32.mrb[0].mxu0
        %1344 = vmatprep.mubr.bf16.mxu0 0
        %1345 = vmatmul.mubr.bf16.gmra.mrb[0].mxu0 %v1279
        %v1346 = vpop.f32.mrb[0].mxu0
        %v1347 = vadd.f32 0.0, %v1346
        %v1348 = vpop.f32.mrb[0].mxu0
        %v1349 = vpop.f32.mrb[0].mxu0
        %v1350 = vadd.f32 0.0, %v1349
        %v1351 = vpop.f32.mrb[0].mxu0
        %1352 = vmatprep.mubr.bf16.mxu0 0
        %1353 = vmatmul.mubr.bf16.gmra.mrb[0].mxu0 %v1282
        %v1354 = vpop.f32.mrb[0].mxu0
        %v1355 = vadd.f32 0.0, %v1354
        %v1356 = vpop.f32.mrb[0].mxu0
        %v1357 = vpop.f32.mrb[0].mxu0
        %v1358 = vadd.f32 0.0, %v1357
        %v1359 = vpop.f32.mrb[0].mxu0
        %1360 = vmatprep.mubr.bf16.mxu0 0
        %1361 = vmatmul.mubr.bf16.gmra.mrb[0].mxu0 %v1285
        %v1362 = vpop.f32.mrb[0].mxu0
        %v1363 = vadd.f32 0.0, %v1362
        %v1364 = vpop.f32.mrb[0].mxu0
        %v1365 = vpop.f32.mrb[0].mxu0
        %v1366 = vadd.f32 0.0, %v1365
        %v1367 = vpop.f32.mrb[0].mxu0
        %1368 = vmatprep.mubr.bf16.mxu0 0
        %1369 = vmatmul.mubr.bf16.gmra.mrb[0].mxu0 %v1288
        %v1370 = vpop.f32.mrb[0].mxu0
        %v1371 = vadd.f32 0.0, %v1370
        %v1372 = vpop.f32.mrb[0].mxu0
        %v1373 = vpop.f32.mrb[0].mxu0
        %v1374 = vadd.f32 0.0, %v1373
        %v1375 = vpop.f32.mrb[0].mxu0
        %1376 = vmatprep.mubr.bf16.mxu0 0
        %1377 = vmatmul.mubr.bf16.gmra.mrb[0].mxu0 %v1291
        %v1378 = vpop.f32.mrb[0].mxu0
        %v1379 = vadd.f32 0.0, %v1378
        %v1380 = vpop.f32.mrb[0].mxu0
        %v1381 = vpop.f32.mrb[0].mxu0
        %v1382 = vadd.f32 0.0, %v1381
        %v1383 = vpop.f32.mrb[0].mxu0
        %1384 = vmatprep.mubr.bf16.mxu0 0
        %1385 = vmatmul.mubr.bf16.gmra.mrb[0].mxu0 %v1294
        %v1386 = vpop.f32.mrb[0].mxu0
        %v1387 = vadd.f32 0.0, %v1386
        %v1388 = vpop.f32.mrb[0].mxu0
        %v1389 = vpop.f32.mrb[0].mxu0
        %v1390 = vadd.f32 0.0, %v1389
        %v1391 = vpop.f32.mrb[0].mxu0
        %1392 = vdwg.mxu0
        %1393 = vxpose.xlu0.c.b16.start [1/8] %v1112, 128
        %1394 = vxpose.xlu0.c.b16.cont [2/8] 0, 128
        %1395 = vxpose.xlu0.c.b16.cont [3/8] 0, 128
        %1396 = vxpose.xlu0.c.b16.cont [4/8] 0, 128
        %1397 = vxpose.xlu0.c.b16.cont [5/8] 0, 128
        %1398 = vxpose.xlu0.c.b16.cont [6/8] 0, 128
        %1399 = vxpose.xlu0.c.b16.cont [7/8] 0, 128
        %1400 = vxpose.xlu0.c.b16.end [8/8] 0, 128
        %v1401 = vpop.trf.xlu0
        %v1402 = vpop.trf.xlu0
        %v1403 = vpop.trf.xlu0
        %v1404 = vpop.trf.xlu0
        %v1405 = vpop.trf.xlu0
        %v1406 = vpop.trf.xlu0
        %v1407 = vpop.trf.xlu0
        %v1408 = vpop.trf.xlu0
        %v1410 = vsel %vm1134, %v1401, 0
        %v1413 = vsel %vm1134, %v1402, 0
        %v1416 = vsel %vm1134, %v1403, 0
        %v1419 = vsel %vm1134, %v1404, 0
        %v1422 = vsel %vm1134, %v1405, 0
        %v1425 = vsel %vm1134, %v1406, 0
        %v1428 = vsel %vm1134, %v1407, 0
        %v1431 = vsel %vm1134, %v1408, 0
        %1433 = vmatprep.subr.bf16.mxu0 0
        %1434 = vmatpush1.bf16.msra.mxu0 %v1108
        %1435 = vmatprep.subr.bf16.mxu0 0
        %1436 = vmatpush1.bf16.msra.mxu0 0
        %1437 = vmatprep.subr.bf16.mxu0 0
        %1438 = vmatpush1.bf16.msra.mxu0 0
        %1439 = vmatprep.subr.bf16.mxu0 0
        %1440 = vmatpush1.bf16.msra.mxu0 0
        %1441 = vmatprep.subr.bf16.mxu0 0
        %1442 = vmatpush1.bf16.msra.mxu0 0
        %1443 = vmatprep.subr.bf16.mxu0 0
        %1444 = vmatpush1.bf16.msra.mxu0 0
        %1445 = vmatprep.subr.bf16.mxu0 0
        %1446 = vmatpush1.bf16.msra.mxu0 0
        %1447 = vmatprep.subr.bf16.mxu0 0
        %1448 = vmatpush1.bf16.msra.mxu0 0
        %1449 = vmatprep.subr.bf16.mxu0 0
        %1450 = vmatpush1.bf16.msra.mxu0 0
        %1451 = vmatprep.subr.bf16.mxu0 0
        %1452 = vmatpush1.bf16.msra.mxu0 0
        %1453 = vmatprep.subr.bf16.mxu0 0
        %1454 = vmatpush1.bf16.msra.mxu0 0
        %1455 = vmatprep.subr.bf16.mxu0 0
        %1456 = vmatpush1.bf16.msra.mxu0 0
        %1457 = vmatprep.subr.bf16.mxu0 0
        %1458 = vmatpush1.bf16.msra.mxu0 0
        %1459 = vmatprep.subr.bf16.mxu0 0
        %1460 = vmatpush1.bf16.msra.mxu0 0
        %1461 = vmatprep.subr.bf16.mxu0 0
        %1462 = vmatpush1.bf16.msra.mxu0 0
        %1463 = vmatprep.subr.bf16.mxu0 0
        %1464 = vmatpush1.bf16.msra.mxu0 0
        %1465 = vmatprep.mubr.bf16.mxu0 0
        %1466 = vmatmul.mubr.bf16.gmra.mrb[0].mxu0 %v1410
        %v1467 = vpop.f32.mrb[0].mxu0
        %v1468 = vadd.f32 0.0, %v1467
        %v1469 = vpop.f32.mrb[0].mxu0
        %v1470 = vpop.f32.mrb[0].mxu0
        %v1471 = vadd.f32 0.0, %v1470
        %v1472 = vpop.f32.mrb[0].mxu0
        %1473 = vmatprep.mubr.bf16.mxu0 0
        %1474 = vmatmul.mubr.bf16.gmra.mrb[0].mxu0 %v1413
        %v1475 = vpop.f32.mrb[0].mxu0
        %v1476 = vadd.f32 0.0, %v1475
        %v1477 = vpop.f32.mrb[0].mxu0
        %v1478 = vpop.f32.mrb[0].mxu0
        %v1479 = vadd.f32 0.0, %v1478
        %v1480 = vpop.f32.mrb[0].mxu0
        %1481 = vmatprep.mubr.bf16.mxu0 0
        %1482 = vmatmul.mubr.bf16.gmra.mrb[0].mxu0 %v1416
        %v1483 = vpop.f32.mrb[0].mxu0
        %v1484 = vadd.f32 0.0, %v1483
        %v1485 = vpop.f32.mrb[0].mxu0
        %v1486 = vpop.f32.mrb[0].mxu0
        %v1487 = vadd.f32 0.0, %v1486
        %v1488 = vpop.f32.mrb[0].mxu0
        %1489 = vmatprep.mubr.bf16.mxu0 0
        %1490 = vmatmul.mubr.bf16.gmra.mrb[0].mxu0 %v1419
        %v1491 = vpop.f32.mrb[0].mxu0
        %v1492 = vadd.f32 0.0, %v1491
        %v1493 = vpop.f32.mrb[0].mxu0
        %v1494 = vpop.f32.mrb[0].mxu0
        %v1495 = vadd.f32 0.0, %v1494
        %v1496 = vpop.f32.mrb[0].mxu0
        %1497 = vmatprep.mubr.bf16.mxu0 0
        %1498 = vmatmul.mubr.bf16.gmra.mrb[0].mxu0 %v1422
        %v1499 = vpop.f32.mrb[0].mxu0
        %v1500 = vadd.f32 0.0, %v1499
        %v1501 = vpop.f32.mrb[0].mxu0
        %v1502 = vpop.f32.mrb[0].mxu0
        %v1503 = vadd.f32 0.0, %v1502
        %v1504 = vpop.f32.mrb[0].mxu0
        %1505 = vmatprep.mubr.bf16.mxu0 0
        %1506 = vmatmul.mubr.bf16.gmra.mrb[0].mxu0 %v1425
        %v1507 = vpop.f32.mrb[0].mxu0
        %v1508 = vadd.f32 0.0, %v1507
        %v1509 = vpop.f32.mrb[0].mxu0
        %v1510 = vpop.f32.mrb[0].mxu0
        %v1511 = vadd.f32 0.0, %v1510
        %v1512 = vpop.f32.mrb[0].mxu0
        %1513 = vmatprep.mubr.bf16.mxu0 0
        %1514 = vmatmul.mubr.bf16.gmra.mrb[0].mxu0 %v1428
        %v1515 = vpop.f32.mrb[0].mxu0
        %v1516 = vadd.f32 0.0, %v1515
        %v1517 = vpop.f32.mrb[0].mxu0
        %v1518 = vpop.f32.mrb[0].mxu0
        %v1519 = vadd.f32 0.0, %v1518
        %v1520 = vpop.f32.mrb[0].mxu0
        %1521 = vmatprep.mubr.bf16.mxu0 0
        %1522 = vmatmul.mubr.bf16.gmra.mrb[0].mxu0 %v1431
        %v1523 = vpop.f32.mrb[0].mxu0
        %v1524 = vadd.f32 0.0, %v1523
        %v1525 = vpop.f32.mrb[0].mxu0
        %v1526 = vpop.f32.mrb[0].mxu0
        %v1527 = vadd.f32 0.0, %v1526
        %v1528 = vpop.f32.mrb[0].mxu0
        %1529 = vdwg.mxu0
        %1530 = vxpose.xlu0.c.b16.start [1/8] %v1113, 128
        %1531 = vxpose.xlu0.c.b16.cont [2/8] 0, 128
        %1532 = vxpose.xlu0.c.b16.cont [3/8] 0, 128
        %1533 = vxpose.xlu0.c.b16.cont [4/8] 0, 128
        %1534 = vxpose.xlu0.c.b16.cont [5/8] 0, 128
        %1535 = vxpose.xlu0.c.b16.cont [6/8] 0, 128
        %1536 = vxpose.xlu0.c.b16.cont [7/8] 0, 128
        %1537 = vxpose.xlu0.c.b16.end [8/8] 0, 128
        %v1538 = vpop.trf.xlu0
        %v1539 = vpop.trf.xlu0
        %v1540 = vpop.trf.xlu0
        %v1541 = vpop.trf.xlu0
        %v1542 = vpop.trf.xlu0
        %v1543 = vpop.trf.xlu0
        %v1544 = vpop.trf.xlu0
        %v1545 = vpop.trf.xlu0
        %v1547 = vsel %vm1134, %v1538, 0
        %v1550 = vsel %vm1134, %v1539, 0
        %v1553 = vsel %vm1134, %v1540, 0
        %v1556 = vsel %vm1134, %v1541, 0
        %v1559 = vsel %vm1134, %v1542, 0
        %v1562 = vsel %vm1134, %v1543, 0
        %v1565 = vsel %vm1134, %v1544, 0
        %v1568 = vsel %vm1134, %v1545, 0
        %1570 = vmatprep.subr.bf16.mxu0 0
        %1571 = vmatpush1.bf16.msra.mxu0 %v1109
        %1572 = vmatprep.subr.bf16.mxu0 0
        %1573 = vmatpush1.bf16.msra.mxu0 0
        %1574 = vmatprep.subr.bf16.mxu0 0
        %1575 = vmatpush1.bf16.msra.mxu0 0
        %1576 = vmatprep.subr.bf16.mxu0 0
        %1577 = vmatpush1.bf16.msra.mxu0 0
        %1578 = vmatprep.subr.bf16.mxu0 0
        %1579 = vmatpush1.bf16.msra.mxu0 0
        %1580 = vmatprep.subr.bf16.mxu0 0
        %1581 = vmatpush1.bf16.msra.mxu0 0
        %1582 = vmatprep.subr.bf16.mxu0 0
        %1583 = vmatpush1.bf16.msra.mxu0 0
        %1584 = vmatprep.subr.bf16.mxu0 0
        %1585 = vmatpush1.bf16.msra.mxu0 0
        %1586 = vmatprep.subr.bf16.mxu0 0
        %1587 = vmatpush1.bf16.msra.mxu0 0
        %1588 = vmatprep.subr.bf16.mxu0 0
        %1589 = vmatpush1.bf16.msra.mxu0 0
        %1590 = vmatprep.subr.bf16.mxu0 0
        %1591 = vmatpush1.bf16.msra.mxu0 0
        %1592 = vmatprep.subr.bf16.mxu0 0
        %1593 = vmatpush1.bf16.msra.mxu0 0
        %1594 = vmatprep.subr.bf16.mxu0 0
        %1595 = vmatpush1.bf16.msra.mxu0 0
        %1596 = vmatprep.subr.bf16.mxu0 0
        %1597 = vmatpush1.bf16.msra.mxu0 0
        %1598 = vmatprep.subr.bf16.mxu0 0
        %1599 = vmatpush1.bf16.msra.mxu0 0
        %1600 = vmatprep.subr.bf16.mxu0 0
        %1601 = vmatpush1.bf16.msra.mxu0 0
        %1602 = vmatprep.mubr.bf16.mxu0 0
        %1603 = vmatmul.mubr.bf16.gmra.mrb[0].mxu0 %v1547
        %v1604 = vpop.f32.mrb[0].mxu0
        %v1605 = vadd.f32 0.0, %v1604
        %v1606 = vpop.f32.mrb[0].mxu0
        %v1607 = vpop.f32.mrb[0].mxu0
        %v1608 = vadd.f32 0.0, %v1607
        %v1609 = vpop.f32.mrb[0].mxu0
        %1610 = vmatprep.mubr.bf16.mxu0 0
        %1611 = vmatmul.mubr.bf16.gmra.mrb[0].mxu0 %v1550
        %v1612 = vpop.f32.mrb[0].mxu0
        %v1613 = vadd.f32 0.0, %v1612
        %v1614 = vpop.f32.mrb[0].mxu0
        %v1615 = vpop.f32.mrb[0].mxu0
        %v1616 = vadd.f32 0.0, %v1615
        %v1617 = vpop.f32.mrb[0].mxu0
        %1618 = vmatprep.mubr.bf16.mxu0 0
        %1619 = vmatmul.mubr.bf16.gmra.mrb[0].mxu0 %v1553
        %v1620 = vpop.f32.mrb[0].mxu0
        %v1621 = vadd.f32 0.0, %v1620
        %v1622 = vpop.f32.mrb[0].mxu0
        %v1623 = vpop.f32.mrb[0].mxu0
        %v1624 = vadd.f32 0.0, %v1623
        %v1625 = vpop.f32.mrb[0].mxu0
        %1626 = vmatprep.mubr.bf16.mxu0 0
        %1627 = vmatmul.mubr.bf16.gmra.mrb[0].mxu0 %v1556
        %v1628 = vpop.f32.mrb[0].mxu0
        %v1629 = vadd.f32 0.0, %v1628
        %v1630 = vpop.f32.mrb[0].mxu0
        %v1631 = vpop.f32.mrb[0].mxu0
        %v1632 = vadd.f32 0.0, %v1631
        %v1633 = vpop.f32.mrb[0].mxu0
        %1634 = vmatprep.mubr.bf16.mxu0 0
        %1635 = vmatmul.mubr.bf16.gmra.mrb[0].mxu0 %v1559
        %v1636 = vpop.f32.mrb[0].mxu0
        %v1637 = vadd.f32 0.0, %v1636
        %v1638 = vpop.f32.mrb[0].mxu0
        %v1639 = vpop.f32.mrb[0].mxu0
        %v1640 = vadd.f32 0.0, %v1639
        %v1641 = vpop.f32.mrb[0].mxu0
        %1642 = vmatprep.mubr.bf16.mxu0 0
        %1643 = vmatmul.mubr.bf16.gmra.mrb[0].mxu0 %v1562
        %v1644 = vpop.f32.mrb[0].mxu0
        %v1645 = vadd.f32 0.0, %v1644
        %v1646 = vpop.f32.mrb[0].mxu0
        %v1647 = vpop.f32.mrb[0].mxu0
        %v1648 = vadd.f32 0.0, %v1647
        %v1649 = vpop.f32.mrb[0].mxu0
        %1650 = vmatprep.mubr.bf16.mxu0 0
        %1651 = vmatmul.mubr.bf16.gmra.mrb[0].mxu0 %v1565
        %v1652 = vpop.f32.mrb[0].mxu0
        %v1653 = vadd.f32 0.0, %v1652
        %v1654 = vpop.f32.mrb[0].mxu0
        %v1655 = vpop.f32.mrb[0].mxu0
        %v1656 = vadd.f32 0.0, %v1655
        %v1657 = vpop.f32.mrb[0].mxu0
        %1658 = vmatprep.mubr.bf16.mxu0 0
        %1659 = vmatmul.mubr.bf16.gmra.mrb[0].mxu0 %v1568
        %v1660 = vpop.f32.mrb[0].mxu0
        %v1661 = vadd.f32 0.0, %v1660
        %v1662 = vpop.f32.mrb[0].mxu0
        %v1663 = vpop.f32.mrb[0].mxu0
        %v1664 = vadd.f32 0.0, %v1663
        %v1665 = vpop.f32.mrb[0].mxu0
        %1666 = vdwg.mxu0
        %v1667 = vmax.f32 %v1194, %v1197
        %v1668 = vmax.f32 %v1667, %v1202
        %v1669 = vmax.f32 %v1668, %v1205
        %v1670 = vmax.f32 %v1669, %v1210
        %v1671 = vmax.f32 %v1670, %v1213
        %v1672 = vmax.f32 %v1671, %v1218
        %v1673 = vmax.f32 %v1672, %v1221
        %v1674 = vmax.f32 %v1673, %v1226
        %v1675 = vmax.f32 %v1674, %v1229
        %v1676 = vmax.f32 %v1675, %v1234
        %v1677 = vmax.f32 %v1676, %v1237
        %v1678 = vmax.f32 %v1677, %v1242
        %v1679 = vmax.f32 %v1678, %v1245
        %v1680 = vmax.f32 %v1679, %v1250
        %v1681 = vmax.f32 %v1680, %v1253
        %v1682 = vrot.slane %v1681, 4
        %v1683 = vmax.f32 %v1681, %v1682
        %v1684 = vrot.slane %v1683, 2
        %v1685 = vmax.f32 %v1683, %v1684
        %v1686 = vrot.slane %v1685, 1
        %v1687 = vmax.f32 %v1685, %v1686
        %v1688 = vmax.f32 %v1331, %v1334
        %v1689 = vmax.f32 %v1688, %v1339
        %v1690 = vmax.f32 %v1689, %v1342
        %v1691 = vmax.f32 %v1690, %v1347
        %v1692 = vmax.f32 %v1691, %v1350
        %v1693 = vmax.f32 %v1692, %v1355
        %v1694 = vmax.f32 %v1693, %v1358
        %v1695 = vmax.f32 %v1694, %v1363
        %v1696 = vmax.f32 %v1695, %v1366
        %v1697 = vmax.f32 %v1696, %v1371
        %v1698 = vmax.f32 %v1697, %v1374
        %v1699 = vmax.f32 %v1698, %v1379
        %v1700 = vmax.f32 %v1699, %v1382
        %v1701 = vmax.f32 %v1700, %v1387
        %v1702 = vmax.f32 %v1701, %v1390
        %v1703 = vrot.slane %v1702, 4
        %v1704 = vmax.f32 %v1702, %v1703
        %v1705 = vrot.slane %v1704, 2
        %v1706 = vmax.f32 %v1704, %v1705
        %v1707 = vrot.slane %v1706, 1
        %v1708 = vmax.f32 %v1706, %v1707
        %v1709 = vmax.f32 %v1468, %v1471
        %v1710 = vmax.f32 %v1709, %v1476
        %v1711 = vmax.f32 %v1710, %v1479
        %v1712 = vmax.f32 %v1711, %v1484
        %v1713 = vmax.f32 %v1712, %v1487
        %v1714 = vmax.f32 %v1713, %v1492
        %v1715 = vmax.f32 %v1714, %v1495
        %v1716 = vmax.f32 %v1715, %v1500
        %v1717 = vmax.f32 %v1716, %v1503
        %v1718 = vmax.f32 %v1717, %v1508
        %v1719 = vmax.f32 %v1718, %v1511
        %v1720 = vmax.f32 %v1719, %v1516
        %v1721 = vmax.f32 %v1720, %v1519
        %v1722 = vmax.f32 %v1721, %v1524
        %v1723 = vmax.f32 %v1722, %v1527
        %v1724 = vrot.slane %v1723, 4
        %v1725 = vmax.f32 %v1723, %v1724
        %v1726 = vrot.slane %v1725, 2
        %v1727 = vmax.f32 %v1725, %v1726
        %v1728 = vrot.slane %v1727, 1
        %v1729 = vmax.f32 %v1727, %v1728
        %v1730 = vmax.f32 %v1605, %v1608
        %v1731 = vmax.f32 %v1730, %v1613
        %v1732 = vmax.f32 %v1731, %v1616
        %v1733 = vmax.f32 %v1732, %v1621
        %v1734 = vmax.f32 %v1733, %v1624
        %v1735 = vmax.f32 %v1734, %v1629
        %v1736 = vmax.f32 %v1735, %v1632
        %v1737 = vmax.f32 %v1736, %v1637
        %v1738 = vmax.f32 %v1737, %v1640
        %v1739 = vmax.f32 %v1738, %v1645
        %v1740 = vmax.f32 %v1739, %v1648
        %v1741 = vmax.f32 %v1740, %v1653
        %v1742 = vmax.f32 %v1741, %v1656
        %v1743 = vmax.f32 %v1742, %v1661
        %v1744 = vmax.f32 %v1743, %v1664
        %v1745 = vrot.slane %v1744, 4
        %v1746 = vmax.f32 %v1744, %v1745
        %v1747 = vrot.slane %v1746, 2
        %v1748 = vmax.f32 %v1746, %v1747
        %v1749 = vrot.slane %v1748, 1
        %v1750 = vmax.f32 %v1748, %v1749
        %v1751 = vsub.f32 %v1194, %v1687
        %v1752 = vsub.f32 %v1197, %v1687
        %v1753 = vsub.f32 %v1202, %v1687
        %v1754 = vsub.f32 %v1205, %v1687
        %v1755 = vsub.f32 %v1210, %v1687
        %v1756 = vsub.f32 %v1213, %v1687
        %v1757 = vsub.f32 %v1218, %v1687
        %v1758 = vsub.f32 %v1221, %v1687
        %v1759 = vsub.f32 %v1226, %v1687
        %v1760 = vsub.f32 %v1229, %v1687
        %v1761 = vsub.f32 %v1234, %v1687
        %v1762 = vsub.f32 %v1237, %v1687
        %v1763 = vsub.f32 %v1242, %v1687
        %v1764 = vsub.f32 %v1245, %v1687
        %v1765 = vsub.f32 %v1250, %v1687
        %v1766 = vsub.f32 %v1253, %v1687
        %v1767 = vsub.f32 %v1331, %v1708
        %v1768 = vsub.f32 %v1334, %v1708
        %v1769 = vsub.f32 %v1339, %v1708
        %v1770 = vsub.f32 %v1342, %v1708
        %v1771 = vsub.f32 %v1347, %v1708
        %v1772 = vsub.f32 %v1350, %v1708
        %v1773 = vsub.f32 %v1355, %v1708
        %v1774 = vsub.f32 %v1358, %v1708
        %v1775 = vsub.f32 %v1363, %v1708
        %v1776 = vsub.f32 %v1366, %v1708
        %v1777 = vsub.f32 %v1371, %v1708
        %v1778 = vsub.f32 %v1374, %v1708
        %v1779 = vsub.f32 %v1379, %v1708
        %v1780 = vsub.f32 %v1382, %v1708
        %v1781 = vsub.f32 %v1387, %v1708
        %v1782 = vsub.f32 %v1390, %v1708
        %v1783 = vsub.f32 %v1468, %v1729
        %v1784 = vsub.f32 %v1471, %v1729
        %v1785 = vsub.f32 %v1476, %v1729
        %v1786 = vsub.f32 %v1479, %v1729
        %v1787 = vsub.f32 %v1484, %v1729
        %v1788 = vsub.f32 %v1487, %v1729
        %v1789 = vsub.f32 %v1492, %v1729
        %v1790 = vsub.f32 %v1495, %v1729
        %v1791 = vsub.f32 %v1500, %v1729
        %v1792 = vsub.f32 %v1503, %v1729
        %v1793 = vsub.f32 %v1508, %v1729
        %v1794 = vsub.f32 %v1511, %v1729
        %v1795 = vsub.f32 %v1516, %v1729
        %v1796 = vsub.f32 %v1519, %v1729
        %v1797 = vsub.f32 %v1524, %v1729
        %v1798 = vsub.f32 %v1527, %v1729
        %v1799 = vsub.f32 %v1605, %v1750
        %v1800 = vsub.f32 %v1608, %v1750
        %v1801 = vsub.f32 %v1613, %v1750
        %v1802 = vsub.f32 %v1616, %v1750
        %v1803 = vsub.f32 %v1621, %v1750
        %v1804 = vsub.f32 %v1624, %v1750
        %v1805 = vsub.f32 %v1629, %v1750
        %v1806 = vsub.f32 %v1632, %v1750
        %v1807 = vsub.f32 %v1637, %v1750
        %v1808 = vsub.f32 %v1640, %v1750
        %v1809 = vsub.f32 %v1645, %v1750
        %v1810 = vsub.f32 %v1648, %v1750
        %v1811 = vsub.f32 %v1653, %v1750
        %v1812 = vsub.f32 %v1656, %v1750
        %v1813 = vsub.f32 %v1661, %v1750
        %v1814 = vsub.f32 %v1664, %v1750
        %v1815 = vmul.f32 %v1751, 1.442695
        %v1816 = vpow.pop %v1815
        %v1817 = vmul.f32 %v1752, 1.442695
        %v1818 = vpow.pop %v1817
        %v1819 = vmul.f32 %v1753, 1.442695
        %v1820 = vpow.pop %v1819
        %v1821 = vmul.f32 %v1754, 1.442695
        %v1822 = vpow.pop %v1821
        %v1823 = vmul.f32 %v1755, 1.442695
        %v1824 = vpow.pop %v1823
        %v1825 = vmul.f32 %v1756, 1.442695
        %v1826 = vpow.pop %v1825
        %v1827 = vmul.f32 %v1757, 1.442695
        %v1828 = vpow.pop %v1827
        %v1829 = vmul.f32 %v1758, 1.442695
        %v1830 = vpow.pop %v1829
        %v1831 = vmul.f32 %v1759, 1.442695
        %v1832 = vpow.pop %v1831
        %v1833 = vmul.f32 %v1760, 1.442695
        %v1834 = vpow.pop %v1833
        %v1835 = vmul.f32 %v1761, 1.442695
        %v1836 = vpow.pop %v1835
        %v1837 = vmul.f32 %v1762, 1.442695
        %v1838 = vpow.pop %v1837
        %v1839 = vmul.f32 %v1763, 1.442695
        %v1840 = vpow.pop %v1839
        %v1841 = vmul.f32 %v1764, 1.442695
        %v1842 = vpow.pop %v1841
        %v1843 = vmul.f32 %v1765, 1.442695
        %v1844 = vpow.pop %v1843
        %v1845 = vmul.f32 %v1766, 1.442695
        %v1846 = vpow.pop %v1845
        %v1847 = vmul.f32 %v1767, 1.442695
        %v1848 = vpow.pop %v1847
        %v1849 = vmul.f32 %v1768, 1.442695
        %v1850 = vpow.pop %v1849
        %v1851 = vmul.f32 %v1769, 1.442695
        %v1852 = vpow.pop %v1851
        %v1853 = vmul.f32 %v1770, 1.442695
        %v1854 = vpow.pop %v1853
        %v1855 = vmul.f32 %v1771, 1.442695
        %v1856 = vpow.pop %v1855
        %v1857 = vmul.f32 %v1772, 1.442695
        %v1858 = vpow.pop %v1857
        %v1859 = vmul.f32 %v1773, 1.442695
        %v1860 = vpow.pop %v1859
        %v1861 = vmul.f32 %v1774, 1.442695
        %v1862 = vpow.pop %v1861
        %v1863 = vmul.f32 %v1775, 1.442695
        %v1864 = vpow.pop %v1863
        %v1865 = vmul.f32 %v1776, 1.442695
        %v1866 = vpow.pop %v1865
        %v1867 = vmul.f32 %v1777, 1.442695
        %v1868 = vpow.pop %v1867
        %v1869 = vmul.f32 %v1778, 1.442695
        %v1870 = vpow.pop %v1869
        %v1871 = vmul.f32 %v1779, 1.442695
        %v1872 = vpow.pop %v1871
        %v1873 = vmul.f32 %v1780, 1.442695
        %v1874 = vpow.pop %v1873
        %v1875 = vmul.f32 %v1781, 1.442695
        %v1876 = vpow.pop %v1875
        %v1877 = vmul.f32 %v1782, 1.442695
        %v1878 = vpow.pop %v1877
        %v1879 = vmul.f32 %v1783, 1.442695
        %v1880 = vpow.pop %v1879
        %v1881 = vmul.f32 %v1784, 1.442695
        %v1882 = vpow.pop %v1881
        %v1883 = vmul.f32 %v1785, 1.442695
        %v1884 = vpow.pop %v1883
        %v1885 = vmul.f32 %v1786, 1.442695
        %v1886 = vpow.pop %v1885
        %v1887 = vmul.f32 %v1787, 1.442695
        %v1888 = vpow.pop %v1887
        %v1889 = vmul.f32 %v1788, 1.442695
        %v1890 = vpow.pop %v1889
        %v1891 = vmul.f32 %v1789, 1.442695
        %v1892 = vpow.pop %v1891
        %v1893 = vmul.f32 %v1790, 1.442695
        %v1894 = vpow.pop %v1893
        %v1895 = vmul.f32 %v1791, 1.442695
        %v1896 = vpow.pop %v1895
        %v1897 = vmul.f32 %v1792, 1.442695
        %v1898 = vpow.pop %v1897
        %v1899 = vmul.f32 %v1793, 1.442695
        %v1900 = vpow.pop %v1899
        %v1901 = vmul.f32 %v1794, 1.442695
        %v1902 = vpow.pop %v1901
        %v1903 = vmul.f32 %v1795, 1.442695
        %v1904 = vpow.pop %v1903
        %v1905 = vmul.f32 %v1796, 1.442695
        %v1906 = vpow.pop %v1905
        %v1907 = vmul.f32 %v1797, 1.442695
        %v1908 = vpow.pop %v1907
        %v1909 = vmul.f32 %v1798, 1.442695
        %v1910 = vpow.pop %v1909
        %v1911 = vmul.f32 %v1799, 1.442695
        %v1912 = vpow.pop %v1911
        %v1913 = vmul.f32 %v1800, 1.442695
        %v1914 = vpow.pop %v1913
        %v1915 = vmul.f32 %v1801, 1.442695
        %v1916 = vpow.pop %v1915
        %v1917 = vmul.f32 %v1802, 1.442695
        %v1918 = vpow.pop %v1917
        %v1919 = vmul.f32 %v1803, 1.442695
        %v1920 = vpow.pop %v1919
        %v1921 = vmul.f32 %v1804, 1.442695
        %v1922 = vpow.pop %v1921
        %v1923 = vmul.f32 %v1805, 1.442695
        %v1924 = vpow.pop %v1923
        %v1925 = vmul.f32 %v1806, 1.442695
        %v1926 = vpow.pop %v1925
        %v1927 = vmul.f32 %v1807, 1.442695
        %v1928 = vpow.pop %v1927
        %v1929 = vmul.f32 %v1808, 1.442695
        %v1930 = vpow.pop %v1929
        %v1931 = vmul.f32 %v1809, 1.442695
        %v1932 = vpow.pop %v1931
        %v1933 = vmul.f32 %v1810, 1.442695
        %v1934 = vpow.pop %v1933
        %v1935 = vmul.f32 %v1811, 1.442695
        %v1936 = vpow.pop %v1935
        %v1937 = vmul.f32 %v1812, 1.442695
        %v1938 = vpow.pop %v1937
        %v1939 = vmul.f32 %v1813, 1.442695
        %v1940 = vpow.pop %v1939
        %v1941 = vmul.f32 %v1814, 1.442695
        %v1942 = vpow.pop %v1941
        %v1943 = vadd.f32 %v1816, %v1818
        %v1944 = vadd.f32 %v1943, %v1820
        %v1945 = vadd.f32 %v1944, %v1822
        %v1946 = vadd.f32 %v1945, %v1824
        %v1947 = vadd.f32 %v1946, %v1826
        %v1948 = vadd.f32 %v1947, %v1828
        %v1949 = vadd.f32 %v1948, %v1830
        %v1950 = vadd.f32 %v1949, %v1832
        %v1951 = vadd.f32 %v1950, %v1834
        %v1952 = vadd.f32 %v1951, %v1836
        %v1953 = vadd.f32 %v1952, %v1838
        %v1954 = vadd.f32 %v1953, %v1840
        %v1955 = vadd.f32 %v1954, %v1842
        %v1956 = vadd.f32 %v1955, %v1844
        %v1957 = vadd.f32 %v1956, %v1846
        %v1958 = vrot.slane %v1957, 4
        %v1959 = vadd.f32 %v1957, %v1958
        %v1960 = vrot.slane %v1959, 2
        %v1961 = vadd.f32 %v1959, %v1960
        %v1962 = vrot.slane %v1961, 1
        %v1963 = vadd.f32 %v1961, %v1962
        %v1964 = vadd.f32 %v1848, %v1850
        %v1965 = vadd.f32 %v1964, %v1852
        %v1966 = vadd.f32 %v1965, %v1854
        %v1967 = vadd.f32 %v1966, %v1856
        %v1968 = vadd.f32 %v1967, %v1858
        %v1969 = vadd.f32 %v1968, %v1860
        %v1970 = vadd.f32 %v1969, %v1862
        %v1971 = vadd.f32 %v1970, %v1864
        %v1972 = vadd.f32 %v1971, %v1866
        %v1973 = vadd.f32 %v1972, %v1868
        %v1974 = vadd.f32 %v1973, %v1870
        %v1975 = vadd.f32 %v1974, %v1872
        %v1976 = vadd.f32 %v1975, %v1874
        %v1977 = vadd.f32 %v1976, %v1876
        %v1978 = vadd.f32 %v1977, %v1878
        %v1979 = vrot.slane %v1978, 4
        %v1980 = vadd.f32 %v1978, %v1979
        %v1981 = vrot.slane %v1980, 2
        %v1982 = vadd.f32 %v1980, %v1981
        %v1983 = vrot.slane %v1982, 1
        %v1984 = vadd.f32 %v1982, %v1983
        %v1985 = vadd.f32 %v1880, %v1882
        %v1986 = vadd.f32 %v1985, %v1884
        %v1987 = vadd.f32 %v1986, %v1886
        %v1988 = vadd.f32 %v1987, %v1888
        %v1989 = vadd.f32 %v1988, %v1890
        %v1990 = vadd.f32 %v1989, %v1892
        %v1991 = vadd.f32 %v1990, %v1894
        %v1992 = vadd.f32 %v1991, %v1896
        %v1993 = vadd.f32 %v1992, %v1898
        %v1994 = vadd.f32 %v1993, %v1900
        %v1995 = vadd.f32 %v1994, %v1902
        %v1996 = vadd.f32 %v1995, %v1904
        %v1997 = vadd.f32 %v1996, %v1906
        %v1998 = vadd.f32 %v1997, %v1908
        %v1999 = vadd.f32 %v1998, %v1910
        %v2000 = vrot.slane %v1999, 4
        %v2001 = vadd.f32 %v1999, %v2000
        %v2002 = vrot.slane %v2001, 2
        %v2003 = vadd.f32 %v2001, %v2002
        %v2004 = vrot.slane %v2003, 1
        %v2005 = vadd.f32 %v2003, %v2004
        %v2006 = vadd.f32 %v1912, %v1914
        %v2007 = vadd.f32 %v2006, %v1916
        %v2008 = vadd.f32 %v2007, %v1918
        %v2009 = vadd.f32 %v2008, %v1920
        %v2010 = vadd.f32 %v2009, %v1922
        %v2011 = vadd.f32 %v2010, %v1924
        %v2012 = vadd.f32 %v2011, %v1926
        %v2013 = vadd.f32 %v2012, %v1928
        %v2014 = vadd.f32 %v2013, %v1930
        %v2015 = vadd.f32 %v2014, %v1932
        %v2016 = vadd.f32 %v2015, %v1934
        %v2017 = vadd.f32 %v2016, %v1936
        %v2018 = vadd.f32 %v2017, %v1938
        %v2019 = vadd.f32 %v2018, %v1940
        %v2020 = vadd.f32 %v2019, %v1942
        %v2021 = vrot.slane %v2020, 4
        %v2022 = vadd.f32 %v2020, %v2021
        %v2023 = vrot.slane %v2022, 2
        %v2024 = vadd.f32 %v2022, %v2023
        %v2025 = vrot.slane %v2024, 1
        %v2026 = vadd.f32 %v2024, %v2025
        %v2027 = vrcp.pop %v1963
        %v2028 = vrcp.pop %v1984
        %v2029 = vrcp.pop %v2005
        %v2030 = vrcp.pop %v2026
        %v2031 = vmul.f32 %v1816, %v2027
        %v2032 = vmul.f32 %v1818, %v2027
        %v2033 = vmul.f32 %v1820, %v2027
        %v2034 = vmul.f32 %v1822, %v2027
        %v2035 = vmul.f32 %v1824, %v2027
        %v2036 = vmul.f32 %v1826, %v2027
        %v2037 = vmul.f32 %v1828, %v2027
        %v2038 = vmul.f32 %v1830, %v2027
        %v2039 = vmul.f32 %v1832, %v2027
        %v2040 = vmul.f32 %v1834, %v2027
        %v2041 = vmul.f32 %v1836, %v2027
        %v2042 = vmul.f32 %v1838, %v2027
        %v2043 = vmul.f32 %v1840, %v2027
        %v2044 = vmul.f32 %v1842, %v2027
        %v2045 = vmul.f32 %v1844, %v2027
        %v2046 = vmul.f32 %v1846, %v2027
        %v2047 = vmul.f32 %v1848, %v2028
        %v2048 = vmul.f32 %v1850, %v2028
        %v2049 = vmul.f32 %v1852, %v2028
        %v2050 = vmul.f32 %v1854, %v2028
        %v2051 = vmul.f32 %v1856, %v2028
        %v2052 = vmul.f32 %v1858, %v2028
        %v2053 = vmul.f32 %v1860, %v2028
        %v2054 = vmul.f32 %v1862, %v2028
        %v2055 = vmul.f32 %v1864, %v2028
        %v2056 = vmul.f32 %v1866, %v2028
        %v2057 = vmul.f32 %v1868, %v2028
        %v2058 = vmul.f32 %v1870, %v2028
        %v2059 = vmul.f32 %v1872, %v2028
        %v2060 = vmul.f32 %v1874, %v2028
        %v2061 = vmul.f32 %v1876, %v2028
        %v2062 = vmul.f32 %v1878, %v2028
        %v2063 = vmul.f32 %v1880, %v2029
        %v2064 = vmul.f32 %v1882, %v2029
        %v2065 = vmul.f32 %v1884, %v2029
        %v2066 = vmul.f32 %v1886, %v2029
        %v2067 = vmul.f32 %v1888, %v2029
        %v2068 = vmul.f32 %v1890, %v2029
        %v2069 = vmul.f32 %v1892, %v2029
        %v2070 = vmul.f32 %v1894, %v2029
        %v2071 = vmul.f32 %v1896, %v2029
        %v2072 = vmul.f32 %v1898, %v2029
        %v2073 = vmul.f32 %v1900, %v2029
        %v2074 = vmul.f32 %v1902, %v2029
        %v2075 = vmul.f32 %v1904, %v2029
        %v2076 = vmul.f32 %v1906, %v2029
        %v2077 = vmul.f32 %v1908, %v2029
        %v2078 = vmul.f32 %v1910, %v2029
        %v2079 = vmul.f32 %v1912, %v2030
        %v2080 = vmul.f32 %v1914, %v2030
        %v2081 = vmul.f32 %v1916, %v2030
        %v2082 = vmul.f32 %v1918, %v2030
        %v2083 = vmul.f32 %v1920, %v2030
        %v2084 = vmul.f32 %v1922, %v2030
        %v2085 = vmul.f32 %v1924, %v2030
        %v2086 = vmul.f32 %v1926, %v2030
        %v2087 = vmul.f32 %v1928, %v2030
        %v2088 = vmul.f32 %v1930, %v2030
        %v2089 = vmul.f32 %v1932, %v2030
        %v2090 = vmul.f32 %v1934, %v2030
        %v2091 = vmul.f32 %v1936, %v2030
        %v2092 = vmul.f32 %v1938, %v2030
        %v2093 = vmul.f32 %v1940, %v2030
        %v2094 = vmul.f32 %v1942, %v2030
        %v2095 = vpack.c.bf16 %v2032, %v2031
        %v2096 = vpack.c.bf16 %v2034, %v2033
        %v2097 = vpack.c.bf16 %v2036, %v2035
        %v2098 = vpack.c.bf16 %v2038, %v2037
        %v2099 = vpack.c.bf16 %v2040, %v2039
        %v2100 = vpack.c.bf16 %v2042, %v2041
        %v2101 = vpack.c.bf16 %v2044, %v2043
        %v2102 = vpack.c.bf16 %v2046, %v2045
        %v2103 = vpack.c.bf16 %v2048, %v2047
        %v2104 = vpack.c.bf16 %v2050, %v2049
        %v2105 = vpack.c.bf16 %v2052, %v2051
        %v2106 = vpack.c.bf16 %v2054, %v2053
        %v2107 = vpack.c.bf16 %v2056, %v2055
        %v2108 = vpack.c.bf16 %v2058, %v2057
        %v2109 = vpack.c.bf16 %v2060, %v2059
        %v2110 = vpack.c.bf16 %v2062, %v2061
        %v2111 = vpack.c.bf16 %v2064, %v2063
        %v2112 = vpack.c.bf16 %v2066, %v2065
        %v2113 = vpack.c.bf16 %v2068, %v2067
        %v2114 = vpack.c.bf16 %v2070, %v2069
        %v2115 = vpack.c.bf16 %v2072, %v2071
        %v2116 = vpack.c.bf16 %v2074, %v2073
        %v2117 = vpack.c.bf16 %v2076, %v2075
        %v2118 = vpack.c.bf16 %v2078, %v2077
        %v2119 = vpack.c.bf16 %v2080, %v2079
        %v2120 = vpack.c.bf16 %v2082, %v2081
        %v2121 = vpack.c.bf16 %v2084, %v2083
        %v2122 = vpack.c.bf16 %v2086, %v2085
        %v2123 = vpack.c.bf16 %v2088, %v2087
        %v2124 = vpack.c.bf16 %v2090, %v2089
        %v2125 = vpack.c.bf16 %v2092, %v2091
        %v2126 = vpack.c.bf16 %v2094, %v2093
        %2127 = vmatprep.subr.bf16.mxu0 0
        %2128 = vmatpush1.bf16.msra.mxu0 %v2095
        %2129 = vmatprep.subr.bf16.mxu0 0
        %2130 = vmatpush1.bf16.msra.mxu0 %v2096
        %2131 = vmatprep.subr.bf16.mxu0 0
        %2132 = vmatpush1.bf16.msra.mxu0 %v2097
        %2133 = vmatprep.subr.bf16.mxu0 0
        %2134 = vmatpush1.bf16.msra.mxu0 %v2098
        %2135 = vmatprep.subr.bf16.mxu0 0
        %2136 = vmatpush1.bf16.msra.mxu0 %v2099
        %2137 = vmatprep.subr.bf16.mxu0 0
        %2138 = vmatpush1.bf16.msra.mxu0 %v2100
        %2139 = vmatprep.subr.bf16.mxu0 0
        %2140 = vmatpush1.bf16.msra.mxu0 %v2101
        %2141 = vmatprep.subr.bf16.mxu0 0
        %2142 = vmatpush1.bf16.msra.mxu0 %v2102
        %2143 = vmatprep.subr.bf16.mxu0 0
        %2144 = vmatpush1.bf16.msra.mxu0 0
        %2145 = vmatprep.subr.bf16.mxu0 0
        %2146 = vmatpush1.bf16.msra.mxu0 0
        %2147 = vmatprep.subr.bf16.mxu0 0
        %2148 = vmatpush1.bf16.msra.mxu0 0
        %2149 = vmatprep.subr.bf16.mxu0 0
        %2150 = vmatpush1.bf16.msra.mxu0 0
        %2151 = vmatprep.subr.bf16.mxu0 0
        %2152 = vmatpush1.bf16.msra.mxu0 0
        %2153 = vmatprep.subr.bf16.mxu0 0
        %2154 = vmatpush1.bf16.msra.mxu0 0
        %2155 = vmatprep.subr.bf16.mxu0 0
        %2156 = vmatpush1.bf16.msra.mxu0 0
        %2157 = vmatprep.subr.bf16.mxu0 0
        %2158 = vmatpush1.bf16.msra.mxu0 0
        %2159 = vmatprep.mubr.bf16.mxu0 0
        %2160 = vmatmul.mubr.bf16.gmra.mrb[0].mxu0 %v1114
        %v2161 = vpop.f32.mrb[0].mxu0
        %v2162 = vadd.f32 0.0, %v2161
        %v2163 = vpop.f32.mrb[0].mxu0
        %v2164 = vpop.f32.mrb[0].mxu0
        %v2165 = vadd.f32 0.0, %v2164
        %v2166 = vpop.f32.mrb[0].mxu0
        %2167 = vdwg.mxu0
        %2168 = vmatprep.subr.bf16.mxu0 0
        %2169 = vmatpush1.bf16.msra.mxu0 %v2103
        %2170 = vmatprep.subr.bf16.mxu0 0
        %2171 = vmatpush1.bf16.msra.mxu0 %v2104
        %2172 = vmatprep.subr.bf16.mxu0 0
        %2173 = vmatpush1.bf16.msra.mxu0 %v2105
        %2174 = vmatprep.subr.bf16.mxu0 0
        %2175 = vmatpush1.bf16.msra.mxu0 %v2106
        %2176 = vmatprep.subr.bf16.mxu0 0
        %2177 = vmatpush1.bf16.msra.mxu0 %v2107
        %2178 = vmatprep.subr.bf16.mxu0 0
        %2179 = vmatpush1.bf16.msra.mxu0 %v2108
        %2180 = vmatprep.subr.bf16.mxu0 0
        %2181 = vmatpush1.bf16.msra.mxu0 %v2109
        %2182 = vmatprep.subr.bf16.mxu0 0
        %2183 = vmatpush1.bf16.msra.mxu0 %v2110
        %2184 = vmatprep.subr.bf16.mxu0 0
        %2185 = vmatpush1.bf16.msra.mxu0 0
        %2186 = vmatprep.subr.bf16.mxu0 0
        %2187 = vmatpush1.bf16.msra.mxu0 0
        %2188 = vmatprep.subr.bf16.mxu0 0
        %2189 = vmatpush1.bf16.msra.mxu0 0
        %2190 = vmatprep.subr.bf16.mxu0 0
        %2191 = vmatpush1.bf16.msra.mxu0 0
        %2192 = vmatprep.subr.bf16.mxu0 0
        %2193 = vmatpush1.bf16.msra.mxu0 0
        %2194 = vmatprep.subr.bf16.mxu0 0
        %2195 = vmatpush1.bf16.msra.mxu0 0
        %2196 = vmatprep.subr.bf16.mxu0 0
        %2197 = vmatpush1.bf16.msra.mxu0 0
        %2198 = vmatprep.subr.bf16.mxu0 0
        %2199 = vmatpush1.bf16.msra.mxu0 0
        %2200 = vmatprep.mubr.bf16.mxu0 0
        %2201 = vmatmul.mubr.bf16.gmra.mrb[0].mxu0 %v1115
        %v2202 = vpop.f32.mrb[0].mxu0
        %v2203 = vadd.f32 0.0, %v2202
        %v2204 = vpop.f32.mrb[0].mxu0
        %v2205 = vpop.f32.mrb[0].mxu0
        %v2206 = vadd.f32 0.0, %v2205
        %v2207 = vpop.f32.mrb[0].mxu0
        %2208 = vdwg.mxu0
        %2209 = vmatprep.subr.bf16.mxu0 0
        %2210 = vmatpush1.bf16.msra.mxu0 %v2111
        %2211 = vmatprep.subr.bf16.mxu0 0
        %2212 = vmatpush1.bf16.msra.mxu0 %v2112
        %2213 = vmatprep.subr.bf16.mxu0 0
        %2214 = vmatpush1.bf16.msra.mxu0 %v2113
        %2215 = vmatprep.subr.bf16.mxu0 0
        %2216 = vmatpush1.bf16.msra.mxu0 %v2114
        %2217 = vmatprep.subr.bf16.mxu0 0
        %2218 = vmatpush1.bf16.msra.mxu0 %v2115
        %2219 = vmatprep.subr.bf16.mxu0 0
        %2220 = vmatpush1.bf16.msra.mxu0 %v2116
        %2221 = vmatprep.subr.bf16.mxu0 0
        %2222 = vmatpush1.bf16.msra.mxu0 %v2117
        %2223 = vmatprep.subr.bf16.mxu0 0
        %2224 = vmatpush1.bf16.msra.mxu0 %v2118
        %2225 = vmatprep.subr.bf16.mxu0 0
        %2226 = vmatpush1.bf16.msra.mxu0 0
        %2227 = vmatprep.subr.bf16.mxu0 0
        %2228 = vmatpush1.bf16.msra.mxu0 0
        %2229 = vmatprep.subr.bf16.mxu0 0
        %2230 = vmatpush1.bf16.msra.mxu0 0
        %2231 = vmatprep.subr.bf16.mxu0 0
        %2232 = vmatpush1.bf16.msra.mxu0 0
        %2233 = vmatprep.subr.bf16.mxu0 0
        %2234 = vmatpush1.bf16.msra.mxu0 0
        %2235 = vmatprep.subr.bf16.mxu0 0
        %2236 = vmatpush1.bf16.msra.mxu0 0
        %2237 = vmatprep.subr.bf16.mxu0 0
        %2238 = vmatpush1.bf16.msra.mxu0 0
        %2239 = vmatprep.subr.bf16.mxu0 0
        %2240 = vmatpush1.bf16.msra.mxu0 0
        %2241 = vmatprep.mubr.bf16.mxu0 0
        %2242 = vmatmul.mubr.bf16.gmra.mrb[0].mxu0 %v1116
        %v2243 = vpop.f32.mrb[0].mxu0
        %v2244 = vadd.f32 0.0, %v2243
        %v2245 = vpop.f32.mrb[0].mxu0
        %v2246 = vpop.f32.mrb[0].mxu0
        %v2247 = vadd.f32 0.0, %v2246
        %v2248 = vpop.f32.mrb[0].mxu0
        %2249 = vdwg.mxu0
        %2250 = vmatprep.subr.bf16.mxu0 0
        %2251 = vmatpush1.bf16.msra.mxu0 %v2119
        %2252 = vmatprep.subr.bf16.mxu0 0
        %2253 = vmatpush1.bf16.msra.mxu0 %v2120
        %2254 = vmatprep.subr.bf16.mxu0 0
        %2255 = vmatpush1.bf16.msra.mxu0 %v2121
        %2256 = vmatprep.subr.bf16.mxu0 0
        %2257 = vmatpush1.bf16.msra.mxu0 %v2122
        %2258 = vmatprep.subr.bf16.mxu0 0
        %2259 = vmatpush1.bf16.msra.mxu0 %v2123
        %2260 = vmatprep.subr.bf16.mxu0 0
        %2261 = vmatpush1.bf16.msra.mxu0 %v2124
        %2262 = vmatprep.subr.bf16.mxu0 0
        %2263 = vmatpush1.bf16.msra.mxu0 %v2125
        %2264 = vmatprep.subr.bf16.mxu0 0
        %2265 = vmatpush1.bf16.msra.mxu0 %v2126
        %2266 = vmatprep.subr.bf16.mxu0 0
        %2267 = vmatpush1.bf16.msra.mxu0 0
        %2268 = vmatprep.subr.bf16.mxu0 0
        %2269 = vmatpush1.bf16.msra.mxu0 0
        %2270 = vmatprep.subr.bf16.mxu0 0
        %2271 = vmatpush1.bf16.msra.mxu0 0
        %2272 = vmatprep.subr.bf16.mxu0 0
        %2273 = vmatpush1.bf16.msra.mxu0 0
        %2274 = vmatprep.subr.bf16.mxu0 0
        %2275 = vmatpush1.bf16.msra.mxu0 0
        %2276 = vmatprep.subr.bf16.mxu0 0
        %2277 = vmatpush1.bf16.msra.mxu0 0
        %2278 = vmatprep.subr.bf16.mxu0 0
        %2279 = vmatpush1.bf16.msra.mxu0 0
        %2280 = vmatprep.subr.bf16.mxu0 0
        %2281 = vmatpush1.bf16.msra.mxu0 0
        %2282 = vmatprep.mubr.bf16.mxu0 0
        %2283 = vmatmul.mubr.bf16.gmra.mrb[0].mxu0 %v1117
        %v2284 = vpop.f32.mrb[0].mxu0
        %v2285 = vadd.f32 0.0, %v2284
        %v2286 = vpop.f32.mrb[0].mxu0
        %v2287 = vpop.f32.mrb[0].mxu0
        %v2288 = vadd.f32 0.0, %v2287
        %v2289 = vpop.f32.mrb[0].mxu0
        %2290 = vdwg.mxu0
        %v2291 = vpack.c.bf16 %v2165, %v2162
        %v2292 = vpack.c.bf16 %v2206, %v2203
        %v2293 = vpack.c.bf16 %v2247, %v2244
        %v2294 = vpack.c.bf16 %v2288, %v2285
        %v2295 = vld [vmem:[%s9] sm:$0xf]
        %v2296 = vld [vmem:[%s9 + $0x4] sm:$0xf]
        %v2297 = vld [vmem:[%s9 + $0x8] sm:$0xf]
        %v2298 = vld [vmem:[%s9 + $0xc] sm:$0xf]
        %v2299 = vld [vmem:[%s9 + $0x10] sm:$0xf]
        %v2300 = vld [vmem:[%s9 + $0x14] sm:$0xf]
        %v2301 = vld [vmem:[%s9 + $0x18] sm:$0xf]
        %v2302 = vld [vmem:[%s9 + $0x1c] sm:$0xf]
        %v2303 = vld [vmem:[%s10] sm:$0xff]
        %v2304 = vld [vmem:[%s10 + $0x8] sm:$0xff]
        %v2305 = vld [vmem:[%s10 + $0x10] sm:$0xff]
        %v2306 = vld [vmem:[%s10 + $0x18] sm:$0xff]
        %v2307 = vld [vmem:[%s10 + $0x20] sm:$0xff]
        %v2308 = vld [vmem:[%s10 + $0x28] sm:$0xff]
        %v2309 = vld [vmem:[%s10 + $0x30] sm:$0xff]
        %v2310 = vld [vmem:[%s10 + $0x38] sm:$0xff]
        %2312 = vset.pattern.permute.xlu0 0
        %2313 = vperm.xlu0 %2312, %v2303
        %v2314 = vpop.permute.xlu0 %2313
        %2317 = vset.pattern.permute.xlu0 0
        %2318 = vperm.xlu0 %2317, %v2304
        %v2319 = vpop.permute.xlu0 %2318
        %2322 = vset.pattern.permute.xlu0 0
        %2323 = vperm.xlu0 %2322, %v2305
        %v2324 = vpop.permute.xlu0 %2323
        %2327 = vset.pattern.permute.xlu0 0
        %2328 = vperm.xlu0 %2327, %v2306
        %v2329 = vpop.permute.xlu0 %2328
        %2332 = vset.pattern.permute.xlu0 0
        %2333 = vperm.xlu0 %2332, %v2307
        %v2334 = vpop.permute.xlu0 %2333
        %2337 = vset.pattern.permute.xlu0 0
        %2338 = vperm.xlu0 %2337, %v2308
        %v2339 = vpop.permute.xlu0 %2338
        %2342 = vset.pattern.permute.xlu0 0
        %2343 = vperm.xlu0 %2342, %v2309
        %v2344 = vpop.permute.xlu0 %2343
        %2347 = vset.pattern.permute.xlu0 0
        %2348 = vperm.xlu0 %2347, %v2310
        %v2349 = vpop.permute.xlu0 %2348
        %v2359 = vunpack.c.l.b16 %v2295
        %v2360 = vunpack.c.l.b16 %v2296
        %v2361 = vunpack.c.l.b16 %v2297
        %v2362 = vunpack.c.l.b16 %v2298
        %v2363 = vunpack.c.l.b16 %v2299
        %v2364 = vunpack.c.l.b16 %v2300
        %v2365 = vunpack.c.l.b16 %v2301
        %v2366 = vunpack.c.l.b16 %v2302
        %v2367 = vpack.c.b16 %v2360, %v2359
        %v2368 = vpack.c.b16 %v2362, %v2361
        %v2369 = vpack.c.b16 %v2364, %v2363
        %v2370 = vpack.c.b16 %v2366, %v2365
        %v2372 = vsel %vm1028, %v2367, 0
        %v2375 = vsel %vm1028, %v2368, 0
        %v2378 = vsel %vm1028, %v2369, 0
        %v2381 = vsel %vm1028, %v2370, 0
        %2383 = vmatprep.subr.bf16.mxu0 0
        %2384 = vmatpush1.bf16.msra.mxu0 %v2291
        %2385 = vmatprep.subr.bf16.mxu0 0
        %2386 = vmatpush1.bf16.msra.mxu0 %v2292
        %2387 = vmatprep.subr.bf16.mxu0 0
        %2388 = vmatpush1.bf16.msra.mxu0 %v2293
        %2389 = vmatprep.subr.bf16.mxu0 0
        %2390 = vmatpush1.bf16.msra.mxu0 %v2294
        %2391 = vmatprep.subr.bf16.mxu0 0
        %2392 = vmatpush1.bf16.msra.mxu0 0
        %2393 = vmatprep.subr.bf16.mxu0 0
        %2394 = vmatpush1.bf16.msra.mxu0 0
        %2395 = vmatprep.subr.bf16.mxu0 0
        %2396 = vmatpush1.bf16.msra.mxu0 0
        %2397 = vmatprep.subr.bf16.mxu0 0
        %2398 = vmatpush1.bf16.msra.mxu0 0
        %2399 = vmatprep.subr.bf16.mxu0 0
        %2400 = vmatpush1.bf16.msra.mxu0 0
        %2401 = vmatprep.subr.bf16.mxu0 0
        %2402 = vmatpush1.bf16.msra.mxu0 0
        %2403 = vmatprep.subr.bf16.mxu0 0
        %2404 = vmatpush1.bf16.msra.mxu0 0
        %2405 = vmatprep.subr.bf16.mxu0 0
        %2406 = vmatpush1.bf16.msra.mxu0 0
        %2407 = vmatprep.subr.bf16.mxu0 0
        %2408 = vmatpush1.bf16.msra.mxu0 0
        %2409 = vmatprep.subr.bf16.mxu0 0
        %2410 = vmatpush1.bf16.msra.mxu0 0
        %2411 = vmatprep.subr.bf16.mxu0 0
        %2412 = vmatpush1.bf16.msra.mxu0 0
        %2413 = vmatprep.subr.bf16.mxu0 0
        %2414 = vmatpush1.bf16.msra.mxu0 0
        %2415 = vmatprep.mubr.bf16.mxu0 0
        %2416 = vmatmul.mubr.bf16.gmra.mrb[0].mxu0 %v2372
        %v2417 = vpop.f32.mrb[0].mxu0
        %v2418 = vadd.f32 %v2314, %v2417
        %v2419 = vpop.f32.mrb[0].mxu0
        %v2420 = vpop.f32.mrb[0].mxu0
        %v2421 = vadd.f32 %v2319, %v2420
        %v2422 = vpop.f32.mrb[0].mxu0
        %2423 = vmatprep.mubr.bf16.mxu0 0
        %2424 = vmatmul.mubr.bf16.gmra.mrb[0].mxu0 %v2375
        %v2425 = vpop.f32.mrb[0].mxu0
        %v2426 = vadd.f32 %v2324, %v2425
        %v2427 = vpop.f32.mrb[0].mxu0
        %v2428 = vpop.f32.mrb[0].mxu0
        %v2429 = vadd.f32 %v2329, %v2428
        %v2430 = vpop.f32.mrb[0].mxu0
        %2431 = vmatprep.mubr.bf16.mxu0 0
        %2432 = vmatmul.mubr.bf16.gmra.mrb[0].mxu0 %v2378
        %v2433 = vpop.f32.mrb[0].mxu0
        %v2434 = vadd.f32 %v2334, %v2433
        %v2435 = vpop.f32.mrb[0].mxu0
        %v2436 = vpop.f32.mrb[0].mxu0
        %v2437 = vadd.f32 %v2339, %v2436
        %v2438 = vpop.f32.mrb[0].mxu0
        %2439 = vmatprep.mubr.bf16.mxu0 0
        %2440 = vmatmul.mubr.bf16.gmra.mrb[0].mxu0 %v2381
        %v2441 = vpop.f32.mrb[0].mxu0
        %v2442 = vadd.f32 %v2344, %v2441
        %v2443 = vpop.f32.mrb[0].mxu0
        %v2444 = vpop.f32.mrb[0].mxu0
        %v2445 = vadd.f32 %v2349, %v2444
        %v2446 = vpop.f32.mrb[0].mxu0
        %2447 = vdwg.mxu0
        %2448 = vst [vmem:[%s587] sm:$0xff] %v2418
        %2449 = vst [vmem:[%s587 + $0x8] sm:$0xff] %v2421
        %2450 = vst [vmem:[%s587 + $0x10] sm:$0xff] %v2426
        %2451 = vst [vmem:[%s587 + $0x18] sm:$0xff] %v2429
        %2452 = vst [vmem:[%s587 + $0x20] sm:$0xff] %v2434
        %2453 = vst [vmem:[%s587 + $0x28] sm:$0xff] %v2437
        %2454 = vst [vmem:[%s587 + $0x30] sm:$0xff] %v2442
        %2455 = vst [vmem:[%s587 + $0x38] sm:$0xff] %v2445
        %s2456 = sand.u32 %s302, 1
        %s2457 = scalar_lea.sflag [#allocation7], %s2456
        %s2458 = sand.u32 %s302, 1
        %s2459 = smul.addr %s2458, 64
        %s2460 = scalar_lea.vmem [#allocation14], %s2459
        // Predicated region
        $region127: #{tpu_custom_call.1} parent=97 // pred_check
          %p2461 = pneg %p312
        $region128: #{tpu_custom_call.1} parent=97 // pred_check_branch
          %2463 = sbr.rel (%p2461) target = $region130
        $region129: #{tpu_custom_call.1} parent=97 // pred_region
          %s2465 = ssub.s32 1024, 1024
          %2466 = vsyncadd %s2457, %s2465
          %s2467 = smul.addr %s36, 16
          %s2468 = sadd.s32 %s37, %s2467
          %s2469 = smul.addr %s2468, 128
          %s2470 = scalar_lea.hbm %s11, %s2469
          %s2471 = sshll.u32 %s2460, 4
          %s2472 = int_to_ptr.vmem [resolvable:$true] %s2471
          %2477 = dma.vmem_to_hbm [thread:$0]  %s2472, 1024, %s2470, %s2457, 128, 256, 8
        $region130: #{tpu_custom_call.1} parent=97 // pred_fallthru
          _
      $region98: #{tpu_custom_call.1} parent=5 // pred_fallthru
        _
      %p2478 = scmp.le.s32.totalorder 2, %s27
      // Predicated region
      $region131: #{tpu_custom_call.1} parent=5 // pred_check
        %p2479 = pneg %p2478
      $region132: #{tpu_custom_call.1} parent=5 // pred_check_branch
        %2481 = sbr.rel (%p2479) target = $region134
      $region133: #{tpu_custom_call.1} parent=5 // pred_region
        %s2482 = ssub.s32 %s27, 2
        // Predicated region
        $region135: #{tpu_custom_call.1} parent=133 // pred_check
          %p2483 = pneg %p318
        $region136: #{tpu_custom_call.1} parent=133 // pred_check_branch
          %2485 = sbr.rel (%p2483) target = $region138
        $region137: #{tpu_custom_call.1} parent=133 // pred_region
          %s2486 = sand.u32 %s303, 1
          %s2487 = scalar_lea.sflag [#allocation7], %s2486
          %s2488 = sand.u32 %s303, 1
          %s2489 = smul.addr %s2488, 64
          %s2490 = scalar_lea.vmem [#allocation14], %s2489
          %2491 = dma.done %s2487, 1024
        $region138: #{tpu_custom_call.1} parent=133 // pred_fallthru
          _
      $region134: #{tpu_custom_call.1} parent=5 // pred_fallthru
        _
    $region6: #{tpu_custom_call.1} parent=1 // loop_footer
      %s31 = sadd.s32 1, %s27
    $region7: #{tpu_custom_call.1} parent=1 // loop_footer_branch
      %26 = sbr.rel target = $region3
    $region8: #{tpu_custom_call.1} parent=1 // loop_exit
      _
    %2492 = vsyncpa [#allocation6], 1
    %s2493 = scalar_lea.sflag [#allocation6], 1
    %2494 = vsyncpa %s2493, 1
    %2495 = vsyncpa [#allocation9], 1
    %s2496 = scalar_lea.sflag [#allocation9], 1
    %2497 = vsyncpa %s2496, 1
    %2498 = vsyncpa [#allocation12], 1
    %2499 = vsyncpa [#allocation7], 1
    %s2500 = scalar_lea.sflag [#allocation7], 1
    %2501 = vsyncpa %s2500, 1

</llo_original>
